<compile_context>
chip_gen: v7x
topology: tpu7x:2x2x1
jax: 0.10.0
libtpu: 0.0.40
codegen_flags: <defaults>
</compile_context>

<pallas_src>
import jax
import jax.numpy as jnp
import numpy as np
from jax.experimental import pallas as pl
from jax.experimental.pallas import tpu as pltpu

# ---- Model hyper-parameters (from Encoder.__init__ / forward) ---------------
LATENT_DIM       = 50
N_FEATURES_PATH  = 50          # must equal LATENT_DIM for the KL broadcast in the torch code
N_FEATURES_TRANS = 64
N_INPUTS         = N_FEATURES_TRANS          # enc1 consumes x[:, :n_features_trans]
H1, H2           = 1000, 100                 # nn.Linear(n_inputs,1000), (1000,100)
D_TOTAL          = N_FEATURES_TRANS + 3 * N_FEATURES_PATH   # 214
NEG_SLOPE        = 0.01                      # F.leaky_relu default

# Lane-padded widths (multiples of 128 so MXU passes are full-width and
# vector stores are unmasked).
H1_PAD     = 1024
H2_PAD     = 128
LATENT_PAD = 128


def _round_up(x, m):
    return (x + m - 1) // m * m


def _leaky_relu(x):
    return jnp.where(x >= 0, x, NEG_SLOPE * x)


def _pad2(a, rows, cols, fill=0.0, dtype=None):
    out = jnp.pad(a, ((0, rows - a.shape[0]), (0, cols - a.shape[1])),
                  constant_values=fill)
    return out.astype(dtype) if dtype is not None else out


# ---- Pallas kernel: fused Encoder forward (MLP + reparam + per-row KL) ------
def encoder_kernel(xt_ref, pm_ref, pv_ref, plv_ref, eps_ref,
                   w1_ref, b1_ref, w2_ref, b2_ref,
                   w3m_ref, b3m_ref, w3l_ref, b3l_ref,
                   mu_ref, lv_ref, z_ref, klrow_ref):
    # enc1 / enc2: bf16 MXU operands, f32 accumulation, f32 elementwise.
    h1 = jnp.dot(xt_ref[...].astype(jnp.bfloat16), w1_ref[...],
                 preferred_element_type=jnp.float32) + b1_ref[...]
    h1 = _leaky_relu(h1)
    h2 = jnp.dot(h1.astype(jnp.bfloat16), w2_ref[...],
                 preferred_element_type=jnp.float32) + b2_ref[...]
    h2 = _leaky_relu(h2).astype(jnp.bfloat16)

    # enc3 split into two lane-contiguous heads: mu and log_var directly.
    mu      = jnp.dot(h2, w3m_ref[...], preferred_element_type=jnp.float32) + b3m_ref[...]
    log_var = jnp.dot(h2, w3l_ref[...], preferred_element_type=jnp.float32) + b3l_ref[...]

    # reparameterization: z = mu + eps * exp(0.5 * log_var)
    z = mu + eps_ref[...] * jnp.exp(0.5 * log_var)

    # KL terms per element; lane padding (prior_mu=0, prior_var=1,
    # prior_log_var=0, mu=log_var=0 on padded lanes) makes padded lanes exactly 0.
    kl_terms = (1.0 + log_var - plv_ref[...]
                - ((mu - pm_ref[...]) ** 2 + jnp.exp(log_var)) / pv_ref[...])

    mu_ref[...]    = mu
    lv_ref[...]    = log_var
    z_ref[...]     = z
    klrow_ref[...] = jnp.sum(kl_terms, axis=-1, keepdims=True)   # (TB, 1) per-row partials


def encoder_forward(x, eps, params):
    """x: (B, D_TOTAL) f32, eps: (B, LATENT_DIM) f32. Returns (mu, log_var, z, kl)."""
    B = x.shape[0]
    TB = 256 if B >= 256 else _round_up(B, 8)
    B_pad = _round_up(B, TB)
    grid_b = B_pad // TB

    # ---- wrapper-side layout plumbing: split lane slices, pad to lane multiples
    lo_mu  = N_FEATURES_TRANS
    lo_var = N_FEATURES_TRANS + N_FEATURES_PATH
    lo_lv  = N_FEATURES_TRANS + 2 * N_FEATURES_PATH
    x_trans   = _pad2(x[:, :N_FEATURES_TRANS],                 B_pad, N_FEATURES_TRANS)
    prior_mu  = _pad2(x[:, lo_mu:lo_mu + N_FEATURES_PATH],     B_pad, LATENT_PAD, 0.0)
    prior_var = _pad2(x[:, lo_var:lo_var + N_FEATURES_PATH],   B_pad, LATENT_PAD, 1.0)
    prior_lv  = _pad2(x[:, lo_lv:lo_lv + N_FEATURES_PATH],     B_pad, LATENT_PAD, 0.0)
    eps_p     = _pad2(eps,                                     B_pad, LATENT_PAD, 0.0)

    # ---- pad & split weights (zero-padded; bf16 for the MXU, biases stay f32)
    bf16 = jnp.bfloat16
    w1p = _pad2(params["w1"], N_FEATURES_TRANS, H1_PAD, 0.0, bf16)
    b1p = _pad2(params["b1"], 1, H1_PAD)
    w2p = _pad2(params["w2"], H1_PAD, H2_PAD, 0.0, bf16)
    b2p = _pad2(params["b2"], 1, H2_PAD)
    w3, b3 = params["w3"], params["b3"]
    w3m = _pad2(w3[:, :LATENT_DIM], H2_PAD, LATENT_PAD, 0.0, bf16)
    w3l = _pad2(w3[:, LATENT_DIM:], H2_PAD, LATENT_PAD, 0.0, bf16)
    b3m = _pad2(b3[:, :LATENT_DIM], 1, LATENT_PAD)
    b3l = _pad2(b3[:, LATENT_DIM:], 1, LATENT_PAD)

    def batch_spec(cols):
        return pl.BlockSpec((TB, cols), lambda i: (i, 0))

    def resident(shape):          # weights: same block every step -> stays in VMEM
        return pl.BlockSpec(shape, lambda i: (0, 0))

    in_specs = [
        batch_spec(N_FEATURES_TRANS),          # x_trans
        batch_spec(LATENT_PAD),                # prior_mu
        batch_spec(LATENT_PAD),                # prior_var
        batch_spec(LATENT_PAD),                # prior_log_var
        batch_spec(LATENT_PAD),                # eps
        resident((N_FEATURES_TRANS, H1_PAD)),  # w1
        resident((1, H1_PAD)),                 # b1
        resident((H1_PAD, H2_PAD)),            # w2
        resident((1, H2_PAD)),                 # b2
        resident((H2_PAD, LATENT_PAD)),        # w3_mu
        resident((1, LATENT_PAD)),             # b3_mu
        resident((H2_PAD, LATENT_PAD)),        # w3_lv
        resident((1, LATENT_PAD)),             # b3_lv
    ]
    out_specs = (
        batch_spec(LATENT_PAD),                   # mu
        batch_spec(LATENT_PAD),                   # log_var
        batch_spec(LATENT_PAD),                   # z
        pl.BlockSpec((TB, 1), lambda i: (i, 0)),  # per-row KL partial sums
    )
    out_shapes = (
        jax.ShapeDtypeStruct((B_pad, LATENT_PAD), jnp.float32),
        jax.ShapeDtypeStruct((B_pad, LATENT_PAD), jnp.float32),
        jax.ShapeDtypeStruct((B_pad, LATENT_PAD), jnp.float32),
        jax.ShapeDtypeStruct((B_pad, 1), jnp.float32),
    )

    flops = 2 * B_pad * (N_FEATURES_TRANS * H1_PAD + H1_PAD * H2_PAD
                         + 2 * H2_PAD * LATENT_PAD)
    transcendentals = 2 * B_pad * LATENT_PAD
    bytes_accessed = int(
        sum(int(a.size) * a.dtype.itemsize for a in
            (x_trans, prior_mu, prior_var, prior_lv, eps_p,
             w1p, b1p, w2p, b2p, w3m, b3m, w3l, b3l))
        + sum(int(np.prod(s.shape)) * 4 for s in out_shapes))

    mu_f, lv_f, z_f, kl_rows = pl.pallas_call(
        encoder_kernel,
        out_shape=out_shapes,
        grid=(grid_b,),
        in_specs=in_specs,
        out_specs=out_specs,
        compiler_params=pltpu.CompilerParams(
            dimension_semantics=("parallel",),
            vmem_limit_bytes=32 * 1024 * 1024),
        cost_estimate=pl.CostEstimate(flops=flops,
                                      transcendentals=transcendentals,
                                      bytes_accessed=bytes_accessed),
    )(x_trans, prior_mu, prior_var, prior_lv, eps_p,
      w1p, b1p, w2p, b2p, w3m, b3m, w3l, b3l)

    mu      = mu_f[:B, :LATENT_DIM]
    log_var = lv_f[:B, :LATENT_DIM]
    z       = z_f[:B, :LATENT_DIM]
    kl      = -0.5 * jnp.sum(kl_rows[:B, 0])
    return mu, log_var, z, kl


# ---- Pure-JAX reference (true f32 semantics of the PyTorch module) ----------
def encoder_ref(x, eps, p):
    h1 = _leaky_relu(x[:, :N_FEATURES_TRANS] @ p["w1"] + p["b1"])
    h2 = _leaky_relu(h1 @ p["w2"] + p["b2"])
    out = h2 @ p["w3"] + p["b3"]
    mu, log_var = out[:, :LATENT_DIM], out[:, LATENT_DIM:]
    z = mu + eps * jnp.exp(0.5 * log_var)
    pm  = x[:, N_FEATURES_TRANS:N_FEATURES_TRANS + N_FEATURES_PATH]
    pv  = x[:, N_FEATURES_TRANS + N_FEATURES_PATH:N_FEATURES_TRANS + 2 * N_FEATURES_PATH]
    plv = x[:, N_FEATURES_TRANS + 2 * N_FEATURES_PATH:N_FEATURES_TRANS + 3 * N_FEATURES_PATH]
    kl = -0.5 * jnp.sum(1.0 + log_var - plv - ((mu - pm) ** 2 + jnp.exp(log_var)) / pv)
    return mu, log_var, z, kl


if __name__ == "__main__":
    key = jax.random.PRNGKey(0)
    k_x, k_pv, k_eps, k1, k2, k3, kb1, kb2, kb3 = jax.random.split(key, 9)

    B = 8
    # x_total = [trans features | prior_mu | prior_var (positive) | prior_log_var]
    x_raw = jax.random.normal(k_x, (B, D_TOTAL), dtype=jnp.float32)
    prior_var = jnp.abs(jax.random.normal(k_pv, (B, N_FEATURES_PATH), jnp.float32)) + 0.5
    lo = N_FEATURES_TRANS + N_FEATURES_PATH
    x = x_raw.at[:, lo:lo + N_FEATURES_PATH].set(prior_var)

    # eps is supplied externally (torch.randn_like in the module's reparameterization)
    eps = jax.random.normal(k_eps, (B, LATENT_DIM), dtype=jnp.float32)

    # Deterministic parameter init, stored as W[in, out] (x @ W + b).
    def init_linear(kw, kb, fan_in, fan_out):
        bound = 1.0 / np.sqrt(fan_in)
        w = jax.random.uniform(kw, (fan_in, fan_out), jnp.float32, -bound, bound)
        b = jax.random.uniform(kb, (1, fan_out), jnp.float32, -bound, bound)
        return w, b

    w1, b1 = init_linear(k1, kb1, N_INPUTS, H1)
    w2, b2 = init_linear(k2, kb2, H1, H2)
    w3, b3 = init_linear(k3, kb3, H2, 2 * LATENT_DIM)
    params = dict(w1=w1, b1=b1, w2=w2, b2=b2, w3=w3, b3=b3)

    mu, log_var, z, kl = jax.block_until_ready(encoder_forward(x, eps, params))

    # Verify against the pure-f32 reference (tolerances cover bf16 MXU operands).
    mu_r, lv_r, z_r, kl_r = encoder_ref(x, eps, params)
    assert np.allclose(np.asarray(mu), np.asarray(mu_r), rtol=5e-2, atol=5e-2)
    assert np.allclose(np.asarray(log_var), np.asarray(lv_r), rtol=5e-2, atol=5e-2)
    assert np.allclose(np.asarray(z), np.asarray(z_r), rtol=5e-2, atol=5e-2)
    kl_v, kl_rv = float(kl), float(kl_r)
    assert abs(kl_v - kl_rv) <= 5e-2 * abs(kl_rv) + 2.0
    assert mu.shape == (B, LATENT_DIM) and z.shape == (B, LATENT_DIM)

    print("KERNEL_OK")
</pallas_src>

<mosaic_0001>
module attributes {stable_mosaic.version = 11 : i64} {
  func.func @encoder_kernel(%arg0: i32, %arg1: memref<8x64xf32, #tpu.memory_space<vmem>>, %arg2: memref<8x128xf32, #tpu.memory_space<vmem>>, %arg3: memref<8x128xf32, #tpu.memory_space<vmem>>, %arg4: memref<8x128xf32, #tpu.memory_space<vmem>>, %arg5: memref<8x128xf32, #tpu.memory_space<vmem>>, %arg6: memref<64x1024xbf16, #tpu.memory_space<vmem>>, %arg7: memref<1x1024xf32, #tpu.memory_space<vmem>>, %arg8: memref<1024x128xbf16, #tpu.memory_space<vmem>>, %arg9: memref<1x128xf32, #tpu.memory_space<vmem>>, %arg10: memref<128x128xbf16, #tpu.memory_space<vmem>>, %arg11: memref<1x128xf32, #tpu.memory_space<vmem>>, %arg12: memref<128x128xbf16, #tpu.memory_space<vmem>>, %arg13: memref<1x128xf32, #tpu.memory_space<vmem>>, %arg14: memref<8x128xf32, #tpu.memory_space<vmem>>, %arg15: memref<8x128xf32, #tpu.memory_space<vmem>>, %arg16: memref<8x128xf32, #tpu.memory_space<vmem>>, %arg17: memref<8x1xf32, #tpu.memory_space<vmem>>) attributes {dimension_semantics = [#tpu.dimension_semantics<parallel>], iteration_bounds = array<i64: 1>, scalar_prefetch = 0 : i64, scratch_operands = 0 : i64, tpu.core_type = #tpu.core_type<tc>, window_params = [{transform_indices = @transform_0, window_bounds = array<i64: 8, 64>}, {transform_indices = @transform_1, window_bounds = array<i64: 8, 128>}, {transform_indices = @transform_2, window_bounds = array<i64: 8, 128>}, {transform_indices = @transform_3, window_bounds = array<i64: 8, 128>}, {transform_indices = @transform_4, window_bounds = array<i64: 8, 128>}, {pipeline_mode = #tpu.pipeline_mode<synchronous>, transform_indices = @transform_5, window_bounds = array<i64: 64, 1024>}, {pipeline_mode = #tpu.pipeline_mode<synchronous>, transform_indices = @transform_6, window_bounds = array<i64: 1, 1024>}, {pipeline_mode = #tpu.pipeline_mode<synchronous>, transform_indices = @transform_7, window_bounds = array<i64: 1024, 128>}, {pipeline_mode = #tpu.pipeline_mode<synchronous>, transform_indices = @transform_8, window_bounds = array<i64: 1, 128>}, {pipeline_mode = #tpu.pipeline_mode<synchronous>, transform_indices = @transform_9, window_bounds = array<i64: 128, 128>}, {pipeline_mode = #tpu.pipeline_mode<synchronous>, transform_indices = @transform_10, window_bounds = array<i64: 1, 128>}, {pipeline_mode = #tpu.pipeline_mode<synchronous>, transform_indices = @transform_11, window_bounds = array<i64: 128, 128>}, {pipeline_mode = #tpu.pipeline_mode<synchronous>, transform_indices = @transform_12, window_bounds = array<i64: 1, 128>}, {transform_indices = @transform_13, window_bounds = array<i64: 8, 128>}, {transform_indices = @transform_14, window_bounds = array<i64: 8, 128>}, {transform_indices = @transform_15, window_bounds = array<i64: 8, 128>}, {transform_indices = @transform_16, window_bounds = array<i64: 8, 1>}]} {
    %c0 = arith.constant 0 : index
    %c0_0 = arith.constant 0 : index
    %0 = vector.load %arg1[%c0, %c0_0] : memref<8x64xf32, #tpu.memory_space<vmem>>, vector<8x64xf32>
    %1 = arith.truncf %0 : vector<8x64xf32> to vector<8x64xbf16>
    %c0_1 = arith.constant 0 : index
    %c0_2 = arith.constant 0 : index
    %2 = vector.load %arg6[%c0_1, %c0_2] : memref<64x1024xbf16, #tpu.memory_space<vmem>>, vector<64x1024xbf16>
    %cst = arith.constant dense<0.000000e+00> : vector<8x1024xf32>
    %3 = tpu.matmul %1, %2, %cst {dimension_numbers = #tpu.dot_dimension_numbers<[1], [0], [0], [1], [0, 0, 1, 1], [], []>} : vector<8x64xbf16>, vector<64x1024xbf16>, vector<8x1024xf32> -> vector<8x1024xf32>
    %c0_3 = arith.constant 0 : index
    %c0_4 = arith.constant 0 : index
    %4 = vector.load %arg7[%c0_3, %c0_4] : memref<1x1024xf32, #tpu.memory_space<vmem>>, vector<1x1024xf32>
    %5 = vector.broadcast %4 : vector<1x1024xf32> to vector<8x1024xf32>
    %6 = arith.addf %3, %5 : vector<8x1024xf32>
    %cst_5 = arith.constant 0.000000e+00 : f32
    %7 = vector.broadcast %cst_5 : f32 to vector<8x1024xf32>
    %8 = arith.cmpf oge, %6, %7 : vector<8x1024xf32>
    %cst_6 = arith.constant 0.00999999977 : f32
    %9 = vector.broadcast %cst_6 : f32 to vector<8x1024xf32>
    %10 = arith.mulf %9, %6 : vector<8x1024xf32>
    %11 = arith.select %8, %6, %10 : vector<8x1024xi1>, vector<8x1024xf32>
    %12 = arith.truncf %11 : vector<8x1024xf32> to vector<8x1024xbf16>
    %c0_7 = arith.constant 0 : index
    %c0_8 = arith.constant 0 : index
    %13 = vector.load %arg8[%c0_7, %c0_8] : memref<1024x128xbf16, #tpu.memory_space<vmem>>, vector<1024x128xbf16>
    %cst_9 = arith.constant dense<0.000000e+00> : vector<8x128xf32>
    %14 = tpu.matmul %12, %13, %cst_9 {dimension_numbers = #tpu.dot_dimension_numbers<[1], [0], [0], [1], [0, 0, 1, 1], [], []>} : vector<8x1024xbf16>, vector<1024x128xbf16>, vector<8x128xf32> -> vector<8x128xf32>
    %c0_10 = arith.constant 0 : index
    %c0_11 = arith.constant 0 : index
    %15 = vector.load %arg9[%c0_10, %c0_11] : memref<1x128xf32, #tpu.memory_space<vmem>>, vector<1x128xf32>
    %16 = vector.broadcast %15 : vector<1x128xf32> to vector<8x128xf32>
    %17 = arith.addf %14, %16 : vector<8x128xf32>
    %cst_12 = arith.constant 0.000000e+00 : f32
    %18 = vector.broadcast %cst_12 : f32 to vector<8x128xf32>
    %19 = arith.cmpf oge, %17, %18 : vector<8x128xf32>
    %cst_13 = arith.constant 0.00999999977 : f32
    %20 = vector.broadcast %cst_13 : f32 to vector<8x128xf32>
    %21 = arith.mulf %20, %17 : vector<8x128xf32>
    %22 = arith.select %19, %17, %21 : vector<8x128xi1>, vector<8x128xf32>
    %23 = arith.truncf %22 : vector<8x128xf32> to vector<8x128xbf16>
    %c0_14 = arith.constant 0 : index
    %c0_15 = arith.constant 0 : index
    %24 = vector.load %arg10[%c0_14, %c0_15] : memref<128x128xbf16, #tpu.memory_space<vmem>>, vector<128x128xbf16>
    %cst_16 = arith.constant dense<0.000000e+00> : vector<8x128xf32>
    %25 = tpu.matmul %23, %24, %cst_16 {dimension_numbers = #tpu.dot_dimension_numbers<[1], [0], [0], [1], [0, 0, 1, 1], [], []>} : vector<8x128xbf16>, vector<128x128xbf16>, vector<8x128xf32> -> vector<8x128xf32>
    %c0_17 = arith.constant 0 : index
    %c0_18 = arith.constant 0 : index
    %26 = vector.load %arg11[%c0_17, %c0_18] : memref<1x128xf32, #tpu.memory_space<vmem>>, vector<1x128xf32>
    %27 = vector.broadcast %26 : vector<1x128xf32> to vector<8x128xf32>
    %28 = arith.addf %25, %27 : vector<8x128xf32>
    %c0_19 = arith.constant 0 : index
    %c0_20 = arith.constant 0 : index
    %29 = vector.load %arg12[%c0_19, %c0_20] : memref<128x128xbf16, #tpu.memory_space<vmem>>, vector<128x128xbf16>
    %cst_21 = arith.constant dense<0.000000e+00> : vector<8x128xf32>
    %30 = tpu.matmul %23, %29, %cst_21 {dimension_numbers = #tpu.dot_dimension_numbers<[1], [0], [0], [1], [0, 0, 1, 1], [], []>} : vector<8x128xbf16>, vector<128x128xbf16>, vector<8x128xf32> -> vector<8x128xf32>
    %c0_22 = arith.constant 0 : index
    %c0_23 = arith.constant 0 : index
    %31 = vector.load %arg13[%c0_22, %c0_23] : memref<1x128xf32, #tpu.memory_space<vmem>>, vector<1x128xf32>
    %32 = vector.broadcast %31 : vector<1x128xf32> to vector<8x128xf32>
    %33 = arith.addf %30, %32 : vector<8x128xf32>
    %c0_24 = arith.constant 0 : index
    %c0_25 = arith.constant 0 : index
    %34 = vector.load %arg5[%c0_24, %c0_25] : memref<8x128xf32, #tpu.memory_space<vmem>>, vector<8x128xf32>
    %cst_26 = arith.constant 5.000000e-01 : f32
    %35 = vector.broadcast %cst_26 : f32 to vector<8x128xf32>
    %36 = arith.mulf %35, %33 : vector<8x128xf32>
    %37 = math.exp %36 : vector<8x128xf32>
    %38 = arith.mulf %34, %37 : vector<8x128xf32>
    %39 = arith.addf %28, %38 : vector<8x128xf32>
    %cst_27 = arith.constant 1.000000e+00 : f32
    %40 = vector.broadcast %cst_27 : f32 to vector<8x128xf32>
    %41 = arith.addf %40, %33 : vector<8x128xf32>
    %c0_28 = arith.constant 0 : index
    %c0_29 = arith.constant 0 : index
    %42 = vector.load %arg4[%c0_28, %c0_29] : memref<8x128xf32, #tpu.memory_space<vmem>>, vector<8x128xf32>
    %43 = arith.subf %41, %42 : vector<8x128xf32>
    %c0_30 = arith.constant 0 : index
    %c0_31 = arith.constant 0 : index
    %44 = vector.load %arg2[%c0_30, %c0_31] : memref<8x128xf32, #tpu.memory_space<vmem>>, vector<8x128xf32>
    %45 = arith.subf %28, %44 : vector<8x128xf32>
    %46 = arith.mulf %45, %45 : vector<8x128xf32>
    %47 = math.exp %33 : vector<8x128xf32>
    %48 = arith.addf %46, %47 : vector<8x128xf32>
    %c0_32 = arith.constant 0 : index
    %c0_33 = arith.constant 0 : index
    %49 = vector.load %arg3[%c0_32, %c0_33] : memref<8x128xf32, #tpu.memory_space<vmem>>, vector<8x128xf32>
    %50 = arith.divf %48, %49 : vector<8x128xf32>
    %51 = arith.subf %43, %50 : vector<8x128xf32>
    %c0_34 = arith.constant 0 : index
    %c0_35 = arith.constant 0 : index
    %52 = vector.load %arg14[%c0_34, %c0_35] : memref<8x128xf32, #tpu.memory_space<vmem>>, vector<8x128xf32>
    tpu.vector_store %arg14[%c0_34, %c0_35], %28 {strides = array<i32>} : memref<8x128xf32, #tpu.memory_space<vmem>>, vector<8x128xf32>,
    %c0_36 = arith.constant 0 : index
    %c0_37 = arith.constant 0 : index
    %53 = vector.load %arg15[%c0_36, %c0_37] : memref<8x128xf32, #tpu.memory_space<vmem>>, vector<8x128xf32>
    tpu.vector_store %arg15[%c0_36, %c0_37], %33 {strides = array<i32>} : memref<8x128xf32, #tpu.memory_space<vmem>>, vector<8x128xf32>,
    %c0_38 = arith.constant 0 : index
    %c0_39 = arith.constant 0 : index
    %54 = vector.load %arg16[%c0_38, %c0_39] : memref<8x128xf32, #tpu.memory_space<vmem>>, vector<8x128xf32>
    tpu.vector_store %arg16[%c0_38, %c0_39], %39 {strides = array<i32>} : memref<8x128xf32, #tpu.memory_space<vmem>>, vector<8x128xf32>,
    %cst_40 = arith.constant dense<0.000000e+00> : vector<8xf32>
    %55 = vector.multi_reduction <add>, %51, %cst_40 [1] : vector<8x128xf32> to vector<8xf32>
    %56 = vector.shape_cast %55 : vector<8xf32> to vector<8x1xf32>
    %c0_41 = arith.constant 0 : index
    %c0_42 = arith.constant 0 : index
    %57 = vector.load %arg17[%c0_41, %c0_42] : memref<8x1xf32, #tpu.memory_space<vmem>>, vector<8x1xf32>
    tpu.vector_store %arg17[%c0_41, %c0_42], %56 {strides = array<i32>} : memref<8x1xf32, #tpu.memory_space<vmem>>, vector<8x1xf32>,
    return
  }
  func.func @transform_0(%arg0: i32) -> (i32, i32) {
    %c0_i32 = arith.constant 0 : i32
    %c0_i32_0 = arith.constant 0 : i32
    return %arg0, %c0_i32 : i32, i32
  }
  func.func @transform_1(%arg0: i32) -> (i32, i32) {
    %c0_i32 = arith.constant 0 : i32
    %c0_i32_0 = arith.constant 0 : i32
    return %arg0, %c0_i32 : i32, i32
  }
  func.func @transform_2(%arg0: i32) -> (i32, i32) {
    %c0_i32 = arith.constant 0 : i32
    %c0_i32_0 = arith.constant 0 : i32
    return %arg0, %c0_i32 : i32, i32
  }
  func.func @transform_3(%arg0: i32) -> (i32, i32) {
    %c0_i32 = arith.constant 0 : i32
    %c0_i32_0 = arith.constant 0 : i32
    return %arg0, %c0_i32 : i32, i32
  }
  func.func @transform_4(%arg0: i32) -> (i32, i32) {
    %c0_i32 = arith.constant 0 : i32
    %c0_i32_0 = arith.constant 0 : i32
    return %arg0, %c0_i32 : i32, i32
  }
  func.func @transform_5(%arg0: i32) -> (i32, i32) {
    %c0_i32 = arith.constant 0 : i32
    %c0_i32_0 = arith.constant 0 : i32
    %c0_i32_1 = arith.constant 0 : i32
    return %c0_i32, %c0_i32_0 : i32, i32
  }
  func.func @transform_6(%arg0: i32) -> (i32, i32) {
    %c0_i32 = arith.constant 0 : i32
    %c0_i32_0 = arith.constant 0 : i32
    %c0_i32_1 = arith.constant 0 : i32
    return %c0_i32, %c0_i32_0 : i32, i32
  }
  func.func @transform_7(%arg0: i32) -> (i32, i32) {
    %c0_i32 = arith.constant 0 : i32
    %c0_i32_0 = arith.constant 0 : i32
    %c0_i32_1 = arith.constant 0 : i32
    return %c0_i32, %c0_i32_0 : i32, i32
  }
  func.func @transform_8(%arg0: i32) -> (i32, i32) {
    %c0_i32 = arith.constant 0 : i32
    %c0_i32_0 = arith.constant 0 : i32
    %c0_i32_1 = arith.constant 0 : i32
    return %c0_i32, %c0_i32_0 : i32, i32
  }
  func.func @transform_9(%arg0: i32) -> (i32, i32) {
    %c0_i32 = arith.constant 0 : i32
    %c0_i32_0 = arith.constant 0 : i32
    %c0_i32_1 = arith.constant 0 : i32
    return %c0_i32, %c0_i32_0 : i32, i32
  }
  func.func @transform_10(%arg0: i32) -> (i32, i32) {
    %c0_i32 = arith.constant 0 : i32
    %c0_i32_0 = arith.constant 0 : i32
    %c0_i32_1 = arith.constant 0 : i32
    return %c0_i32, %c0_i32_0 : i32, i32
  }
  func.func @transform_11(%arg0: i32) -> (i32, i32) {
    %c0_i32 = arith.constant 0 : i32
    %c0_i32_0 = arith.constant 0 : i32
    %c0_i32_1 = arith.constant 0 : i32
    return %c0_i32, %c0_i32_0 : i32, i32
  }
  func.func @transform_12(%arg0: i32) -> (i32, i32) {
    %c0_i32 = arith.constant 0 : i32
    %c0_i32_0 = arith.constant 0 : i32
    %c0_i32_1 = arith.constant 0 : i32
    return %c0_i32, %c0_i32_0 : i32, i32
  }
  func.func @transform_13(%arg0: i32) -> (i32, i32) {
    %c0_i32 = arith.constant 0 : i32
    %c0_i32_0 = arith.constant 0 : i32
    return %arg0, %c0_i32 : i32, i32
  }
  func.func @transform_14(%arg0: i32) -> (i32, i32) {
    %c0_i32 = arith.constant 0 : i32
    %c0_i32_0 = arith.constant 0 : i32
    return %arg0, %c0_i32 : i32, i32
  }
  func.func @transform_15(%arg0: i32) -> (i32, i32) {
    %c0_i32 = arith.constant 0 : i32
    %c0_i32_0 = arith.constant 0 : i32
    return %arg0, %c0_i32 : i32, i32
  }
  func.func @transform_16(%arg0: i32) -> (i32, i32) {
    %c0_i32 = arith.constant 0 : i32
    %c0_i32_0 = arith.constant 0 : i32
    return %arg0, %c0_i32 : i32, i32
  }
}

</mosaic_0001>

<llo_original>
// kernel: tpu_custom_call.1
$region0: #{tpu_custom_call.1}
  #allocation0 [shape = 'u32[]', space=smem, size = 0x4, offset = 0x4, fixed_abs, tag = 'smem constant byte address 0x4 - core index']
  #allocation1 [shape = 'u32[144,128]{1,0:T(1,128)}', space=vmem, size = 0x12000, scoped, tag = 'internal scratch']
  %s0 = inlined_call_operand.hbm [shape: f32[8,64], index: 0, kind: input, shape index: {}]
  %s1 = inlined_call_operand.hbm [shape: f32[8,128], index: 1, kind: input, shape index: {}]
  %s2 = inlined_call_operand.hbm [shape: f32[8,128], index: 2, kind: input, shape index: {}]
  %s3 = inlined_call_operand.vmem [shape: f32[8,128], index: 3, kind: input, shape index: {}]
  %s4 = inlined_call_operand.hbm [shape: f32[8,128], index: 4, kind: input, shape index: {}]
  %s5 = inlined_call_operand.hbm [shape: bf16[64,1024], index: 5, kind: input, shape index: {}]
  %s6 = inlined_call_operand.vmem [shape: f32[1,1024], index: 6, kind: input, shape index: {}]
  %s7 = inlined_call_operand.hbm [shape: bf16[1024,128], index: 7, kind: input, shape index: {}]
  %s8 = inlined_call_operand.vmem [shape: f32[1,128], index: 8, kind: input, shape index: {}]
  %s9 = inlined_call_operand.hbm [shape: bf16[128,128], index: 9, kind: input, shape index: {}]
  %s10 = inlined_call_operand.vmem [shape: f32[1,128], index: 10, kind: input, shape index: {}]
  %s11 = inlined_call_operand.hbm [shape: bf16[128,128], index: 11, kind: input, shape index: {}]
  %s12 = inlined_call_operand.vmem [shape: f32[1,128], index: 12, kind: input, shape index: {}]
  %s13 = inlined_call_operand.hbm [shape: f32[8,128], index: 13, kind: output, shape index: {0}]
  %s14 = inlined_call_operand.hbm [shape: f32[8,128], index: 14, kind: output, shape index: {1}]
  %s15 = inlined_call_operand.hbm [shape: f32[8,128], index: 15, kind: output, shape index: {2}]
  %s16 = inlined_call_operand.vmem [shape: f32[8,1], index: 16, kind: output, shape index: {3}]
  %17 = xla_tuple %s13, %s14, %s15, %s16
  %s18 = sld [smem:[#allocation0]]
  $region118: #{tpu_custom_call.1} parent=0
    _
  %s20 = ssub.s32 1, %s18
  %s21 = scalar_select 0, %s20, %s18
  $region1: #{tpu_custom_call.1} parent=0
    #allocation2 [shape = 'u8[4096]{0}', space=vmem, size = 0x1000, scoped, tag = 'input window, operand 0, single buffered']
    #allocation3 [shape = 's32[1]{0}', space=sflag, size = 0x4, scoped, tag = 'scoped memory for tpu_custom_call.1']
    #allocation4 [shape = 's32[1]{0}', space=sflag, size = 0x4, scoped, tag = 'scoped memory for tpu_custom_call.1']
    #allocation5 [shape = 'u8[4096]{0}', space=vmem, size = 0x1000, scoped, tag = 'input window, operand 1, single buffered']
    #allocation6 [shape = 's32[1]{0}', space=sflag, size = 0x4, scoped, tag = 'scoped memory for tpu_custom_call.1']
    #allocation7 [shape = 'u8[4096]{0}', space=vmem, size = 0x1000, scoped, tag = 'input window, operand 2, single buffered']
    #allocation8 [shape = 'u8[4096]{0}', space=vmem, size = 0x1000, scoped, tag = 'input window, operand 4, single buffered']
    #allocation9 [shape = 's32[1]{0}', space=sflag, size = 0x4, scoped, tag = 'scoped memory for tpu_custom_call.1']
    #allocation10 [shape = 'u8[131072]{0}', space=vmem, size = 0x20000, scoped, tag = 'input window, operand 5, single buffered']
    #allocation11 [shape = 'u8[262144]{0}', space=vmem, size = 0x40000, scoped, tag = 'input window, operand 7, single buffered']
    #allocation12 [shape = 's32[1]{0}', space=sflag, size = 0x4, scoped, tag = 'scoped memory for tpu_custom_call.1']
    #allocation13 [shape = 'u8[32768]{0}', space=vmem, size = 0x8000, scoped, tag = 'input window, operand 9, single buffered']
    #allocation14 [shape = 'u8[32768]{0}', space=vmem, size = 0x8000, scoped, tag = 'input window, operand 11, single buffered']
    #allocation15 [shape = 's32[1]{0}', space=sflag, size = 0x4, scoped, tag = 'scoped memory for tpu_custom_call.1']
    #allocation16 [shape = 'u8[4096]{0}', space=vmem, size = 0x1000, scoped, tag = 'output window, operand 0, single buffered']
    #allocation17 [shape = 'u8[4096]{0}', space=vmem, size = 0x1000, scoped, tag = 'output window, operand 1, single buffered']
    #allocation18 [shape = 's32[1]{0}', space=sflag, size = 0x4, scoped, tag = 'scoped memory for tpu_custom_call.1']
    #allocation19 [shape = 'u8[4096]{0}', space=vmem, size = 0x1000, scoped, tag = 'output window, operand 2, single buffered']
    %22 = vsyncpa [#allocation3], 0
    %23 = vsyncpa [#allocation6], 0
    %24 = vsyncpa [#allocation9], 0
    %25 = vsyncpa [#allocation12], 0
    %26 = vsyncpa [#allocation15], 0
    %27 = vsyncpa [#allocation4], 0
    %28 = vsyncpa [#allocation18], 0
    // Predicated region
    $region2: #{tpu_custom_call.1} parent=1 // pred_check
      _
    $region3: #{tpu_custom_call.1} parent=1 // pred_check_branch
      %30 = sbr.rel (0) target = $region5
    $region4: #{tpu_custom_call.1} parent=1 // pred_region
      %s32 = ssub.s32 128, 128
      %33 = vsyncadd [#allocation3], %s32
      %s35 = sshll.u32 [#allocation2], 4
      %s36 = int_to_ptr.vmem [resolvable:$true] %s35
      %38 = dma.hbm_to_vmem [thread:$0]  %s0, 128, %s36, [#allocation3]
    $region5: #{tpu_custom_call.1} parent=1 // pred_fallthru
      _
    // Predicated region
    $region6: #{tpu_custom_call.1} parent=1 // pred_check
      _
    $region7: #{tpu_custom_call.1} parent=1 // pred_check_branch
      %40 = sbr.rel (0) target = $region9
    $region8: #{tpu_custom_call.1} parent=1 // pred_region
      %s42 = ssub.s32 128, 128
      %43 = vsyncadd [#allocation6], %s42
      %s45 = sshll.u32 [#allocation5], 4
      %s46 = int_to_ptr.vmem [resolvable:$true] %s45
      %48 = dma.hbm_to_vmem [thread:$0]  %s1, 128, %s46, [#allocation6]
    $region9: #{tpu_custom_call.1} parent=1 // pred_fallthru
      _
    // Predicated region
    $region10: #{tpu_custom_call.1} parent=1 // pred_check
      _
    $region11: #{tpu_custom_call.1} parent=1 // pred_check_branch
      %50 = sbr.rel (0) target = $region13
    $region12: #{tpu_custom_call.1} parent=1 // pred_region
      %s52 = ssub.s32 128, 128
      %53 = vsyncadd [#allocation6], %s52
      %s55 = sshll.u32 [#allocation7], 4
      %s56 = int_to_ptr.vmem [resolvable:$true] %s55
      %58 = dma.hbm_to_vmem [thread:$0]  %s2, 128, %s56, [#allocation6]
    $region13: #{tpu_custom_call.1} parent=1 // pred_fallthru
      _
    // Predicated region
    $region14: #{tpu_custom_call.1} parent=1 // pred_check
      _
    $region15: #{tpu_custom_call.1} parent=1 // pred_check_branch
      %60 = sbr.rel (0) target = $region17
    $region16: #{tpu_custom_call.1} parent=1 // pred_region
      _
    $region17: #{tpu_custom_call.1} parent=1 // pred_fallthru
      _
    // Predicated region
    $region18: #{tpu_custom_call.1} parent=1 // pred_check
      _
    $region19: #{tpu_custom_call.1} parent=1 // pred_check_branch
      %62 = sbr.rel (0) target = $region21
    $region20: #{tpu_custom_call.1} parent=1 // pred_region
      %s64 = ssub.s32 128, 128
      %65 = vsyncadd [#allocation9], %s64
      %s67 = sshll.u32 [#allocation8], 4
      %s68 = int_to_ptr.vmem [resolvable:$true] %s67
      %70 = dma.hbm_to_vmem [thread:$0]  %s4, 128, %s68, [#allocation9]
    $region21: #{tpu_custom_call.1} parent=1 // pred_fallthru
      _
    // Predicated region
    $region22: #{tpu_custom_call.1} parent=1 // pred_check
      _
    $region23: #{tpu_custom_call.1} parent=1 // pred_check_branch
      %72 = sbr.rel (0) target = $region25
    $region24: #{tpu_custom_call.1} parent=1 // pred_region
      %s74 = ssub.s32 4096, 4096
      %75 = vsyncadd [#allocation9], %s74
      %s76 = sshll.u32 [#allocation10], 4
      %s77 = int_to_ptr.vmem [resolvable:$true] %s76
      %82 = dma.hbm_to_vmem [thread:$0]  %s5, 4096, %s77, [#allocation9], 512, 512, 32
    $region25: #{tpu_custom_call.1} parent=1 // pred_fallthru
      _
    // Predicated region
    $region26: #{tpu_custom_call.1} parent=1 // pred_check
      _
    $region27: #{tpu_custom_call.1} parent=1 // pred_check_branch
      %84 = sbr.rel (0) target = $region29
    $region28: #{tpu_custom_call.1} parent=1 // pred_region
      _
    $region29: #{tpu_custom_call.1} parent=1 // pred_fallthru
      _
    // Predicated region
    $region30: #{tpu_custom_call.1} parent=1 // pred_check
      _
    $region31: #{tpu_custom_call.1} parent=1 // pred_check_branch
      %86 = sbr.rel (0) target = $region33
    $region32: #{tpu_custom_call.1} parent=1 // pred_region
      %s88 = ssub.s32 8192, 8192
      %89 = vsyncadd [#allocation12], %s88
      %s90 = sshll.u32 [#allocation11], 4
      %s91 = int_to_ptr.vmem [resolvable:$true] %s90
      %96 = dma.hbm_to_vmem [thread:$0]  %s7, 8192, %s91, [#allocation12], 64, 64, 4
    $region33: #{tpu_custom_call.1} parent=1 // pred_fallthru
      _
    // Predicated region
    $region34: #{tpu_custom_call.1} parent=1 // pred_check
      _
    $region35: #{tpu_custom_call.1} parent=1 // pred_check_branch
      %98 = sbr.rel (0) target = $region37
    $region36: #{tpu_custom_call.1} parent=1 // pred_region
      _
    $region37: #{tpu_custom_call.1} parent=1 // pred_fallthru
      _
    // Predicated region
    $region38: #{tpu_custom_call.1} parent=1 // pred_check
      _
    $region39: #{tpu_custom_call.1} parent=1 // pred_check_branch
      %100 = sbr.rel (0) target = $region41
    $region40: #{tpu_custom_call.1} parent=1 // pred_region
      %s102 = ssub.s32 1024, 1024
      %103 = vsyncadd [#allocation12], %s102
      %s104 = sshll.u32 [#allocation13], 4
      %s105 = int_to_ptr.vmem [resolvable:$true] %s104
      %110 = dma.hbm_to_vmem [thread:$0]  %s9, 1024, %s105, [#allocation12], 64, 64, 4
    $region41: #{tpu_custom_call.1} parent=1 // pred_fallthru
      _
    // Predicated region
    $region42: #{tpu_custom_call.1} parent=1 // pred_check
      _
    $region43: #{tpu_custom_call.1} parent=1 // pred_check_branch
      %112 = sbr.rel (0) target = $region45
    $region44: #{tpu_custom_call.1} parent=1 // pred_region
      _
    $region45: #{tpu_custom_call.1} parent=1 // pred_fallthru
      _
    // Predicated region
    $region46: #{tpu_custom_call.1} parent=1 // pred_check
      _
    $region47: #{tpu_custom_call.1} parent=1 // pred_check_branch
      %114 = sbr.rel (0) target = $region49
    $region48: #{tpu_custom_call.1} parent=1 // pred_region
      %s116 = ssub.s32 1024, 1024
      %117 = vsyncadd [#allocation15], %s116
      %s118 = sshll.u32 [#allocation14], 4
      %s119 = int_to_ptr.vmem [resolvable:$true] %s118
      %124 = dma.hbm_to_vmem [thread:$0]  %s11, 1024, %s119, [#allocation15], 64, 64, 4
    $region49: #{tpu_custom_call.1} parent=1 // pred_fallthru
      _
    // Predicated region
    $region50: #{tpu_custom_call.1} parent=1 // pred_check
      _
    $region51: #{tpu_custom_call.1} parent=1 // pred_check_branch
      %126 = sbr.rel (0) target = $region53
    $region52: #{tpu_custom_call.1} parent=1 // pred_region
      _
    $region53: #{tpu_custom_call.1} parent=1 // pred_fallthru
      _
    // Predicated region
    $region54: #{tpu_custom_call.1} parent=1 // pred_check
      _
    $region55: #{tpu_custom_call.1} parent=1 // pred_check_branch
      %128 = sbr.rel (0) target = $region57
    $region56: #{tpu_custom_call.1} parent=1 // pred_region
      %129 = dma.done [#allocation3], 128
    $region57: #{tpu_custom_call.1} parent=1 // pred_fallthru
      _
    // Predicated region
    $region58: #{tpu_custom_call.1} parent=1 // pred_check
      _
    $region59: #{tpu_custom_call.1} parent=1 // pred_check_branch
      %131 = sbr.rel (0) target = $region61
    $region60: #{tpu_custom_call.1} parent=1 // pred_region
      %132 = dma.done [#allocation6], 128
    $region61: #{tpu_custom_call.1} parent=1 // pred_fallthru
      _
    // Predicated region
    $region62: #{tpu_custom_call.1} parent=1 // pred_check
      _
    $region63: #{tpu_custom_call.1} parent=1 // pred_check_branch
      %134 = sbr.rel (0) target = $region65
    $region64: #{tpu_custom_call.1} parent=1 // pred_region
      %135 = dma.done [#allocation6], 128
    $region65: #{tpu_custom_call.1} parent=1 // pred_fallthru
      _
    // Predicated region
    $region66: #{tpu_custom_call.1} parent=1 // pred_check
      _
    $region67: #{tpu_custom_call.1} parent=1 // pred_check_branch
      %137 = sbr.rel (0) target = $region69
    $region68: #{tpu_custom_call.1} parent=1 // pred_region
      %138 = dma.done [#allocation9], 128
    $region69: #{tpu_custom_call.1} parent=1 // pred_fallthru
      _
    // Predicated region
    $region70: #{tpu_custom_call.1} parent=1 // pred_check
      _
    $region71: #{tpu_custom_call.1} parent=1 // pred_check_branch
      %140 = sbr.rel (0) target = $region73
    $region72: #{tpu_custom_call.1} parent=1 // pred_region
      %141 = dma.done [#allocation9], 4096
    $region73: #{tpu_custom_call.1} parent=1 // pred_fallthru
      _
    // Predicated region
    $region74: #{tpu_custom_call.1} parent=1 // pred_check
      _
    $region75: #{tpu_custom_call.1} parent=1 // pred_check_branch
      %143 = sbr.rel (0) target = $region77
    $region76: #{tpu_custom_call.1} parent=1 // pred_region
      %144 = dma.done [#allocation12], 8192
    $region77: #{tpu_custom_call.1} parent=1 // pred_fallthru
      _
    // Predicated region
    $region78: #{tpu_custom_call.1} parent=1 // pred_check
      _
    $region79: #{tpu_custom_call.1} parent=1 // pred_check_branch
      %146 = sbr.rel (0) target = $region81
    $region80: #{tpu_custom_call.1} parent=1 // pred_region
      %147 = dma.done [#allocation12], 1024
    $region81: #{tpu_custom_call.1} parent=1 // pred_fallthru
      _
    // Predicated region
    $region82: #{tpu_custom_call.1} parent=1 // pred_check
      _
    $region83: #{tpu_custom_call.1} parent=1 // pred_check_branch
      %149 = sbr.rel (0) target = $region85
    $region84: #{tpu_custom_call.1} parent=1 // pred_region
      %150 = dma.done [#allocation15], 1024
    $region85: #{tpu_custom_call.1} parent=1 // pred_fallthru
      _
    %v152 = vld [vmem:[#allocation2] sm:$0xff]
    %v153 = vpack.c.bf16 %v152, %v152
    %v154 = vld [vmem:[#allocation10] sm:$0xff]
    %v155 = vld [vmem:[#allocation10 + $0x8] sm:$0xff]
    %v156 = vld [vmem:[#allocation10 + $0x10] sm:$0xff]
    %v157 = vld [vmem:[#allocation10 + $0x18] sm:$0xff]
    %v158 = vld [vmem:[#allocation10 + $0x20] sm:$0xff]
    %v159 = vld [vmem:[#allocation10 + $0x28] sm:$0xff]
    %v160 = vld [vmem:[#allocation10 + $0x30] sm:$0xff]
    %v161 = vld [vmem:[#allocation10 + $0x38] sm:$0xff]
    %v162 = vld [vmem:[#allocation10 + $0x40] sm:$0xff]
    %v163 = vld [vmem:[#allocation10 + $0x48] sm:$0xff]
    %v164 = vld [vmem:[#allocation10 + $0x50] sm:$0xff]
    %v165 = vld [vmem:[#allocation10 + $0x58] sm:$0xff]
    %v166 = vld [vmem:[#allocation10 + $0x60] sm:$0xff]
    %v167 = vld [vmem:[#allocation10 + $0x68] sm:$0xff]
    %v168 = vld [vmem:[#allocation10 + $0x70] sm:$0xff]
    %v169 = vld [vmem:[#allocation10 + $0x78] sm:$0xff]
    %v170 = vld [vmem:[#allocation10 + $0x80] sm:$0xff]
    %v171 = vld [vmem:[#allocation10 + $0x88] sm:$0xff]
    %v172 = vld [vmem:[#allocation10 + $0x90] sm:$0xff]
    %v173 = vld [vmem:[#allocation10 + $0x98] sm:$0xff]
    %v174 = vld [vmem:[#allocation10 + $0xa0] sm:$0xff]
    %v175 = vld [vmem:[#allocation10 + $0xa8] sm:$0xff]
    %v176 = vld [vmem:[#allocation10 + $0xb0] sm:$0xff]
    %v177 = vld [vmem:[#allocation10 + $0xb8] sm:$0xff]
    %v178 = vld [vmem:[#allocation10 + $0xc0] sm:$0xff]
    %v179 = vld [vmem:[#allocation10 + $0xc8] sm:$0xff]
    %v180 = vld [vmem:[#allocation10 + $0xd0] sm:$0xff]
    %v181 = vld [vmem:[#allocation10 + $0xd8] sm:$0xff]
    %v182 = vld [vmem:[#allocation10 + $0xe0] sm:$0xff]
    %v183 = vld [vmem:[#allocation10 + $0xe8] sm:$0xff]
    %v184 = vld [vmem:[#allocation10 + $0xf0] sm:$0xff]
    %v185 = vld [vmem:[#allocation10 + $0xf8] sm:$0xff]
    %v186 = vld [vmem:[%s6] sm:$0xff]
    %v188 = vlaneseq
    %v189 = vshrl.u32 %v188, 7
    %v190 = vsub.s32 0, %v189
    %v191 = vrot.slane %v186, %v190
    %v192 = vlaneseq
    %v193 = vshrl.u32 %v192, 7
    %v194 = vsub.s32 1, %v193
    %v195 = vrot.slane %v186, %v194
    %v196 = vlaneseq
    %v197 = vshrl.u32 %v196, 7
    %v198 = vsub.s32 2, %v197
    %v199 = vrot.slane %v186, %v198
    %v200 = vlaneseq
    %v201 = vshrl.u32 %v200, 7
    %v202 = vsub.s32 3, %v201
    %v203 = vrot.slane %v186, %v202
    %v204 = vlaneseq
    %v205 = vshrl.u32 %v204, 7
    %v206 = vsub.s32 4, %v205
    %v207 = vrot.slane %v186, %v206
    %v208 = vlaneseq
    %v209 = vshrl.u32 %v208, 7
    %v210 = vsub.s32 5, %v209
    %v211 = vrot.slane %v186, %v210
    %v212 = vlaneseq
    %v213 = vshrl.u32 %v212, 7
    %v214 = vsub.s32 6, %v213
    %v215 = vrot.slane %v186, %v214
    %v216 = vlaneseq
    %v217 = vshrl.u32 %v216, 7
    %v218 = vsub.s32 7, %v217
    %v219 = vrot.slane %v186, %v218
    %v260 = vunpack.c.l.b16 %v154
    %v261 = vunpack.c.h.b16 %v154
    %v262 = vunpack.c.l.b16 %v155
    %v263 = vunpack.c.h.b16 %v155
    %v264 = vunpack.c.l.b16 %v156
    %v265 = vunpack.c.h.b16 %v156
    %v266 = vunpack.c.l.b16 %v157
    %v267 = vunpack.c.h.b16 %v157
    %v268 = vunpack.c.l.b16 %v158
    %v269 = vunpack.c.h.b16 %v158
    %v270 = vunpack.c.l.b16 %v159
    %v271 = vunpack.c.h.b16 %v159
    %v272 = vunpack.c.l.b16 %v160
    %v273 = vunpack.c.h.b16 %v160
    %v274 = vunpack.c.l.b16 %v161
    %v275 = vunpack.c.h.b16 %v161
    %v276 = vunpack.c.l.b16 %v162
    %v277 = vunpack.c.h.b16 %v162
    %v278 = vunpack.c.l.b16 %v163
    %v279 = vunpack.c.h.b16 %v163
    %v280 = vunpack.c.l.b16 %v164
    %v281 = vunpack.c.h.b16 %v164
    %v282 = vunpack.c.l.b16 %v165
    %v283 = vunpack.c.h.b16 %v165
    %v284 = vunpack.c.l.b16 %v166
    %v285 = vunpack.c.h.b16 %v166
    %v286 = vunpack.c.l.b16 %v167
    %v287 = vunpack.c.h.b16 %v167
    %v288 = vunpack.c.l.b16 %v168
    %v289 = vunpack.c.h.b16 %v168
    %v290 = vunpack.c.l.b16 %v169
    %v291 = vunpack.c.h.b16 %v169
    %v292 = vunpack.c.l.b16 %v170
    %v293 = vunpack.c.h.b16 %v170
    %v294 = vunpack.c.l.b16 %v171
    %v295 = vunpack.c.h.b16 %v171
    %v296 = vunpack.c.l.b16 %v172
    %v297 = vunpack.c.h.b16 %v172
    %v298 = vunpack.c.l.b16 %v173
    %v299 = vunpack.c.h.b16 %v173
    %v300 = vunpack.c.l.b16 %v174
    %v301 = vunpack.c.h.b16 %v174
    %v302 = vunpack.c.l.b16 %v175
    %v303 = vunpack.c.h.b16 %v175
    %v304 = vunpack.c.l.b16 %v176
    %v305 = vunpack.c.h.b16 %v176
    %v306 = vunpack.c.l.b16 %v177
    %v307 = vunpack.c.h.b16 %v177
    %v308 = vunpack.c.l.b16 %v178
    %v309 = vunpack.c.h.b16 %v178
    %v310 = vunpack.c.l.b16 %v179
    %v311 = vunpack.c.h.b16 %v179
    %v312 = vunpack.c.l.b16 %v180
    %v313 = vunpack.c.h.b16 %v180
    %v314 = vunpack.c.l.b16 %v181
    %v315 = vunpack.c.h.b16 %v181
    %v316 = vunpack.c.l.b16 %v182
    %v317 = vunpack.c.h.b16 %v182
    %v318 = vunpack.c.l.b16 %v183
    %v319 = vunpack.c.h.b16 %v183
    %v320 = vunpack.c.l.b16 %v184
    %v321 = vunpack.c.h.b16 %v184
    %v322 = vunpack.c.l.b16 %v185
    %v323 = vunpack.c.h.b16 %v185
    %v324 = vpack.c.b16 %v268, %v260
    %v325 = vpack.c.b16 %v269, %v261
    %v326 = vpack.c.b16 %v270, %v262
    %v327 = vpack.c.b16 %v271, %v263
    %v328 = vpack.c.b16 %v272, %v264
    %v329 = vpack.c.b16 %v273, %v265
    %v330 = vpack.c.b16 %v274, %v266
    %v331 = vpack.c.b16 %v275, %v267
    %v332 = vpack.c.b16 %v284, %v276
    %v333 = vpack.c.b16 %v285, %v277
    %v334 = vpack.c.b16 %v286, %v278
    %v335 = vpack.c.b16 %v287, %v279
    %v336 = vpack.c.b16 %v288, %v280
    %v337 = vpack.c.b16 %v289, %v281
    %v338 = vpack.c.b16 %v290, %v282
    %v339 = vpack.c.b16 %v291, %v283
    %v340 = vpack.c.b16 %v300, %v292
    %v341 = vpack.c.b16 %v301, %v293
    %v342 = vpack.c.b16 %v302, %v294
    %v343 = vpack.c.b16 %v303, %v295
    %v344 = vpack.c.b16 %v304, %v296
    %v345 = vpack.c.b16 %v305, %v297
    %v346 = vpack.c.b16 %v306, %v298
    %v347 = vpack.c.b16 %v307, %v299
    %v348 = vpack.c.b16 %v316, %v308
    %v349 = vpack.c.b16 %v317, %v309
    %v350 = vpack.c.b16 %v318, %v310
    %v351 = vpack.c.b16 %v319, %v311
    %v352 = vpack.c.b16 %v320, %v312
    %v353 = vpack.c.b16 %v321, %v313
    %v354 = vpack.c.b16 %v322, %v314
    %v355 = vpack.c.b16 %v323, %v315
    %vm388 = vcmask 523264
    %v390 = vsel %vm388, %v153, 0
    %392 = vmatprep.subr.bf16.mxu0 %v325
    %393 = vmatpush1.bf16.msra.mxu0 %v324
    %394 = vmatprep.subr.bf16.mxu0 %v333
    %395 = vmatpush1.bf16.msra.mxu0 %v332
    %396 = vmatprep.subr.bf16.mxu0 %v341
    %397 = vmatpush1.bf16.msra.mxu0 %v340
    %398 = vmatprep.subr.bf16.mxu0 %v349
    %399 = vmatpush1.bf16.msra.mxu0 %v348
    %400 = vmatprep.subr.bf16.mxu0 0
    %401 = vmatpush1.bf16.msra.mxu0 0
    %402 = vmatprep.subr.bf16.mxu0 0
    %403 = vmatpush1.bf16.msra.mxu0 0
    %404 = vmatprep.subr.bf16.mxu0 0
    %405 = vmatpush1.bf16.msra.mxu0 0
    %406 = vmatprep.subr.bf16.mxu0 0
    %407 = vmatpush1.bf16.msra.mxu0 0
    %408 = vmatprep.subr.bf16.mxu0 0
    %409 = vmatpush1.bf16.msra.mxu0 0
    %410 = vmatprep.subr.bf16.mxu0 0
    %411 = vmatpush1.bf16.msra.mxu0 0
    %412 = vmatprep.subr.bf16.mxu0 0
    %413 = vmatpush1.bf16.msra.mxu0 0
    %414 = vmatprep.subr.bf16.mxu0 0
    %415 = vmatpush1.bf16.msra.mxu0 0
    %416 = vmatprep.subr.bf16.mxu0 0
    %417 = vmatpush1.bf16.msra.mxu0 0
    %418 = vmatprep.subr.bf16.mxu0 0
    %419 = vmatpush1.bf16.msra.mxu0 0
    %420 = vmatprep.subr.bf16.mxu0 0
    %421 = vmatpush1.bf16.msra.mxu0 0
    %422 = vmatprep.subr.bf16.mxu0 0
    %423 = vmatpush1.bf16.msra.mxu0 0
    %424 = vmatprep.mubr.bf16.mxu0 0
    %425 = vmatmul.mubr.bf16.gmra.mrb[0].mxu0 %v390
    %v426 = vpop.f32.mrb[0].mxu0
    %v427 = vadd.f32 %v191, %v426
    %v428 = vpop.f32.mrb[0].mxu0
    %v429 = vadd.f32 %v195, %v428
    %v430 = vpop.f32.mrb[0].mxu0
    %v431 = vpop.f32.mrb[0].mxu0
    %432 = vdwg.mxu0
    %433 = vmatprep.subr.bf16.mxu0 %v327
    %434 = vmatpush1.bf16.msra.mxu0 %v326
    %435 = vmatprep.subr.bf16.mxu0 %v335
    %436 = vmatpush1.bf16.msra.mxu0 %v334
    %437 = vmatprep.subr.bf16.mxu0 %v343
    %438 = vmatpush1.bf16.msra.mxu0 %v342
    %439 = vmatprep.subr.bf16.mxu0 %v351
    %440 = vmatpush1.bf16.msra.mxu0 %v350
    %441 = vmatprep.subr.bf16.mxu0 0
    %442 = vmatpush1.bf16.msra.mxu0 0
    %443 = vmatprep.subr.bf16.mxu0 0
    %444 = vmatpush1.bf16.msra.mxu0 0
    %445 = vmatprep.subr.bf16.mxu0 0
    %446 = vmatpush1.bf16.msra.mxu0 0
    %447 = vmatprep.subr.bf16.mxu0 0
    %448 = vmatpush1.bf16.msra.mxu0 0
    %449 = vmatprep.subr.bf16.mxu0 0
    %450 = vmatpush1.bf16.msra.mxu0 0
    %451 = vmatprep.subr.bf16.mxu0 0
    %452 = vmatpush1.bf16.msra.mxu0 0
    %453 = vmatprep.subr.bf16.mxu0 0
    %454 = vmatpush1.bf16.msra.mxu0 0
    %455 = vmatprep.subr.bf16.mxu0 0
    %456 = vmatpush1.bf16.msra.mxu0 0
    %457 = vmatprep.subr.bf16.mxu0 0
    %458 = vmatpush1.bf16.msra.mxu0 0
    %459 = vmatprep.subr.bf16.mxu0 0
    %460 = vmatpush1.bf16.msra.mxu0 0
    %461 = vmatprep.subr.bf16.mxu0 0
    %462 = vmatpush1.bf16.msra.mxu0 0
    %463 = vmatprep.subr.bf16.mxu0 0
    %464 = vmatpush1.bf16.msra.mxu0 0
    %465 = vmatprep.mubr.bf16.mxu0 0
    %466 = vmatmul.mubr.bf16.gmra.mrb[0].mxu0 %v390
    %v467 = vpop.f32.mrb[0].mxu0
    %v468 = vadd.f32 %v199, %v467
    %v469 = vpop.f32.mrb[0].mxu0
    %v470 = vadd.f32 %v203, %v469
    %v471 = vpop.f32.mrb[0].mxu0
    %v472 = vpop.f32.mrb[0].mxu0
    %473 = vdwg.mxu0
    %474 = vmatprep.subr.bf16.mxu0 %v329
    %475 = vmatpush1.bf16.msra.mxu0 %v328
    %476 = vmatprep.subr.bf16.mxu0 %v337
    %477 = vmatpush1.bf16.msra.mxu0 %v336
    %478 = vmatprep.subr.bf16.mxu0 %v345
    %479 = vmatpush1.bf16.msra.mxu0 %v344
    %480 = vmatprep.subr.bf16.mxu0 %v353
    %481 = vmatpush1.bf16.msra.mxu0 %v352
    %482 = vmatprep.subr.bf16.mxu0 0
    %483 = vmatpush1.bf16.msra.mxu0 0
    %484 = vmatprep.subr.bf16.mxu0 0
    %485 = vmatpush1.bf16.msra.mxu0 0
    %486 = vmatprep.subr.bf16.mxu0 0
    %487 = vmatpush1.bf16.msra.mxu0 0
    %488 = vmatprep.subr.bf16.mxu0 0
    %489 = vmatpush1.bf16.msra.mxu0 0
    %490 = vmatprep.subr.bf16.mxu0 0
    %491 = vmatpush1.bf16.msra.mxu0 0
    %492 = vmatprep.subr.bf16.mxu0 0
    %493 = vmatpush1.bf16.msra.mxu0 0
    %494 = vmatprep.subr.bf16.mxu0 0
    %495 = vmatpush1.bf16.msra.mxu0 0
    %496 = vmatprep.subr.bf16.mxu0 0
    %497 = vmatpush1.bf16.msra.mxu0 0
    %498 = vmatprep.subr.bf16.mxu0 0
    %499 = vmatpush1.bf16.msra.mxu0 0
    %500 = vmatprep.subr.bf16.mxu0 0
    %501 = vmatpush1.bf16.msra.mxu0 0
    %502 = vmatprep.subr.bf16.mxu0 0
    %503 = vmatpush1.bf16.msra.mxu0 0
    %504 = vmatprep.subr.bf16.mxu0 0
    %505 = vmatpush1.bf16.msra.mxu0 0
    %506 = vmatprep.mubr.bf16.mxu0 0
    %507 = vmatmul.mubr.bf16.gmra.mrb[0].mxu0 %v390
    %v508 = vpop.f32.mrb[0].mxu0
    %v509 = vadd.f32 %v207, %v508
    %v510 = vpop.f32.mrb[0].mxu0
    %v511 = vadd.f32 %v211, %v510
    %v512 = vpop.f32.mrb[0].mxu0
    %v513 = vpop.f32.mrb[0].mxu0
    %514 = vdwg.mxu0
    %515 = vmatprep.subr.bf16.mxu0 %v331
    %516 = vmatpush1.bf16.msra.mxu0 %v330
    %517 = vmatprep.subr.bf16.mxu0 %v339
    %518 = vmatpush1.bf16.msra.mxu0 %v338
    %519 = vmatprep.subr.bf16.mxu0 %v347
    %520 = vmatpush1.bf16.msra.mxu0 %v346
    %521 = vmatprep.subr.bf16.mxu0 %v355
    %522 = vmatpush1.bf16.msra.mxu0 %v354
    %523 = vmatprep.subr.bf16.mxu0 0
    %524 = vmatpush1.bf16.msra.mxu0 0
    %525 = vmatprep.subr.bf16.mxu0 0
    %526 = vmatpush1.bf16.msra.mxu0 0
    %527 = vmatprep.subr.bf16.mxu0 0
    %528 = vmatpush1.bf16.msra.mxu0 0
    %529 = vmatprep.subr.bf16.mxu0 0
    %530 = vmatpush1.bf16.msra.mxu0 0
    %531 = vmatprep.subr.bf16.mxu0 0
    %532 = vmatpush1.bf16.msra.mxu0 0
    %533 = vmatprep.subr.bf16.mxu0 0
    %534 = vmatpush1.bf16.msra.mxu0 0
    %535 = vmatprep.subr.bf16.mxu0 0
    %536 = vmatpush1.bf16.msra.mxu0 0
    %537 = vmatprep.subr.bf16.mxu0 0
    %538 = vmatpush1.bf16.msra.mxu0 0
    %539 = vmatprep.subr.bf16.mxu0 0
    %540 = vmatpush1.bf16.msra.mxu0 0
    %541 = vmatprep.subr.bf16.mxu0 0
    %542 = vmatpush1.bf16.msra.mxu0 0
    %543 = vmatprep.subr.bf16.mxu0 0
    %544 = vmatpush1.bf16.msra.mxu0 0
    %545 = vmatprep.subr.bf16.mxu0 0
    %546 = vmatpush1.bf16.msra.mxu0 0
    %547 = vmatprep.mubr.bf16.mxu0 0
    %548 = vmatmul.mubr.bf16.gmra.mrb[0].mxu0 %v390
    %v549 = vpop.f32.mrb[0].mxu0
    %v550 = vadd.f32 %v215, %v549
    %v551 = vpop.f32.mrb[0].mxu0
    %v552 = vadd.f32 %v219, %v551
    %v553 = vpop.f32.mrb[0].mxu0
    %v554 = vpop.f32.mrb[0].mxu0
    %555 = vdwg.mxu0
    %vm556 = vcmp.ge.f32.partialorder %v427, 0.0
    %vm557 = vcmp.ge.f32.partialorder %v429, 0.0
    %vm558 = vcmp.ge.f32.partialorder %v468, 0.0
    %vm559 = vcmp.ge.f32.partialorder %v470, 0.0
    %vm560 = vcmp.ge.f32.partialorder %v509, 0.0
    %vm561 = vcmp.ge.f32.partialorder %v511, 0.0
    %vm562 = vcmp.ge.f32.partialorder %v550, 0.0
    %vm563 = vcmp.ge.f32.partialorder %v552, 0.0
    %v564 = vmul.f32 %v427, 0.01
    %v565 = vmul.f32 %v429, 0.01
    %v566 = vmul.f32 %v468, 0.01
    %v567 = vmul.f32 %v470, 0.01
    %v568 = vmul.f32 %v509, 0.01
    %v569 = vmul.f32 %v511, 0.01
    %v570 = vmul.f32 %v550, 0.01
    %v571 = vmul.f32 %v552, 0.01
    %v572 = vsel %vm556, %v427, %v564
    %v573 = vsel %vm557, %v429, %v565
    %v574 = vsel %vm558, %v468, %v566
    %v575 = vsel %vm559, %v470, %v567
    %v576 = vsel %vm560, %v509, %v568
    %v577 = vsel %vm561, %v511, %v569
    %v578 = vsel %vm562, %v550, %v570
    %v579 = vsel %vm563, %v552, %v571
    %v580 = vpack.c.bf16 %v572, %v572
    %v581 = vpack.c.bf16 %v573, %v573
    %v582 = vpack.c.bf16 %v574, %v574
    %v583 = vpack.c.bf16 %v575, %v575
    %v584 = vpack.c.bf16 %v576, %v576
    %v585 = vpack.c.bf16 %v577, %v577
    %v586 = vpack.c.bf16 %v578, %v578
    %v587 = vpack.c.bf16 %v579, %v579
    %v588 = vld [vmem:[#allocation11] sm:$0xf]
    %v589 = vld [vmem:[#allocation11 + $0x4] sm:$0xf]
    %v590 = vld [vmem:[#allocation11 + $0x8] sm:$0xf]
    %v591 = vld [vmem:[#allocation11 + $0xc] sm:$0xf]
    %v592 = vld [vmem:[#allocation11 + $0x10] sm:$0xf]
    %v593 = vld [vmem:[#allocation11 + $0x14] sm:$0xf]
    %v594 = vld [vmem:[#allocation11 + $0x18] sm:$0xf]
    %v595 = vld [vmem:[#allocation11 + $0x1c] sm:$0xf]
    %v596 = vld [vmem:[#allocation11 + $0x20] sm:$0xf]
    %v597 = vld [vmem:[#allocation11 + $0x24] sm:$0xf]
    %v598 = vld [vmem:[#allocation11 + $0x28] sm:$0xf]
    %v599 = vld [vmem:[#allocation11 + $0x2c] sm:$0xf]
    %v600 = vld [vmem:[#allocation11 + $0x30] sm:$0xf]
    %v601 = vld [vmem:[#allocation11 + $0x34] sm:$0xf]
    %v602 = vld [vmem:[#allocation11 + $0x38] sm:$0xf]
    %v603 = vld [vmem:[#allocation11 + $0x3c] sm:$0xf]
    %v604 = vld [vmem:[#allocation11 + $0x40] sm:$0xf]
    %v605 = vld [vmem:[#allocation11 + $0x44] sm:$0xf]
    %v606 = vld [vmem:[#allocation11 + $0x48] sm:$0xf]
    %v607 = vld [vmem:[#allocation11 + $0x4c] sm:$0xf]
    %v608 = vld [vmem:[#allocation11 + $0x50] sm:$0xf]
    %v609 = vld [vmem:[#allocation11 + $0x54] sm:$0xf]
    %v610 = vld [vmem:[#allocation11 + $0x58] sm:$0xf]
    %v611 = vld [vmem:[#allocation11 + $0x5c] sm:$0xf]
    %v612 = vld [vmem:[#allocation11 + $0x60] sm:$0xf]
    %v613 = vld [vmem:[#allocation11 + $0x64] sm:$0xf]
    %v614 = vld [vmem:[#allocation11 + $0x68] sm:$0xf]
    %v615 = vld [vmem:[#allocation11 + $0x6c] sm:$0xf]
    %v616 = vld [vmem:[#allocation11 + $0x70] sm:$0xf]
    %v617 = vld [vmem:[#allocation11 + $0x74] sm:$0xf]
    %v618 = vld [vmem:[#allocation11 + $0x78] sm:$0xf]
    %v619 = vld [vmem:[#allocation11 + $0x7c] sm:$0xf]
    %v620 = vld [vmem:[#allocation11 + $0x80] sm:$0xf]
    %v621 = vld [vmem:[#allocation11 + $0x84] sm:$0xf]
    %v622 = vld [vmem:[#allocation11 + $0x88] sm:$0xf]
    %v623 = vld [vmem:[#allocation11 + $0x8c] sm:$0xf]
    %v624 = vld [vmem:[#allocation11 + $0x90] sm:$0xf]
    %v625 = vld [vmem:[#allocation11 + $0x94] sm:$0xf]
    %v626 = vld [vmem:[#allocation11 + $0x98] sm:$0xf]
    %v627 = vld [vmem:[#allocation11 + $0x9c] sm:$0xf]
    %v628 = vld [vmem:[#allocation11 + $0xa0] sm:$0xf]
    %v629 = vld [vmem:[#allocation11 + $0xa4] sm:$0xf]
    %v630 = vld [vmem:[#allocation11 + $0xa8] sm:$0xf]
    %v631 = vld [vmem:[#allocation11 + $0xac] sm:$0xf]
    %v632 = vld [vmem:[#allocation11 + $0xb0] sm:$0xf]
    %v633 = vld [vmem:[#allocation11 + $0xb4] sm:$0xf]
    %v634 = vld [vmem:[#allocation11 + $0xb8] sm:$0xf]
    %v635 = vld [vmem:[#allocation11 + $0xbc] sm:$0xf]
    %v636 = vld [vmem:[#allocation11 + $0xc0] sm:$0xf]
    %v637 = vld [vmem:[#allocation11 + $0xc4] sm:$0xf]
    %v638 = vld [vmem:[#allocation11 + $0xc8] sm:$0xf]
    %v639 = vld [vmem:[#allocation11 + $0xcc] sm:$0xf]
    %v640 = vld [vmem:[#allocation11 + $0xd0] sm:$0xf]
    %v641 = vld [vmem:[#allocation11 + $0xd4] sm:$0xf]
    %v642 = vld [vmem:[#allocation11 + $0xd8] sm:$0xf]
    %v643 = vld [vmem:[#allocation11 + $0xdc] sm:$0xf]
    %v644 = vld [vmem:[#allocation11 + $0xe0] sm:$0xf]
    %v645 = vld [vmem:[#allocation11 + $0xe4] sm:$0xf]
    %v646 = vld [vmem:[#allocation11 + $0xe8] sm:$0xf]
    %v647 = vld [vmem:[#allocation11 + $0xec] sm:$0xf]
    %v648 = vld [vmem:[#allocation11 + $0xf0] sm:$0xf]
    %v649 = vld [vmem:[#allocation11 + $0xf4] sm:$0xf]
    %v650 = vld [vmem:[#allocation11 + $0xf8] sm:$0xf]
    %v651 = vld [vmem:[#allocation11 + $0xfc] sm:$0xf]
    %v652 = vld [vmem:[#allocation11 + $0x100] sm:$0xf]
    %v653 = vld [vmem:[#allocation11 + $0x104] sm:$0xf]
    %v654 = vld [vmem:[#allocation11 + $0x108] sm:$0xf]
    %v655 = vld [vmem:[#allocation11 + $0x10c] sm:$0xf]
    %v656 = vld [vmem:[#allocation11 + $0x110] sm:$0xf]
    %v657 = vld [vmem:[#allocation11 + $0x114] sm:$0xf]
    %v658 = vld [vmem:[#allocation11 + $0x118] sm:$0xf]
    %v659 = vld [vmem:[#allocation11 + $0x11c] sm:$0xf]
    %v660 = vld [vmem:[#allocation11 + $0x120] sm:$0xf]
    %v661 = vld [vmem:[#allocation11 + $0x124] sm:$0xf]
    %v662 = vld [vmem:[#allocation11 + $0x128] sm:$0xf]
    %v663 = vld [vmem:[#allocation11 + $0x12c] sm:$0xf]
    %v664 = vld [vmem:[#allocation11 + $0x130] sm:$0xf]
    %v665 = vld [vmem:[#allocation11 + $0x134] sm:$0xf]
    %v666 = vld [vmem:[#allocation11 + $0x138] sm:$0xf]
    %v667 = vld [vmem:[#allocation11 + $0x13c] sm:$0xf]
    %v668 = vld [vmem:[#allocation11 + $0x140] sm:$0xf]
    %v669 = vld [vmem:[#allocation11 + $0x144] sm:$0xf]
    %v670 = vld [vmem:[#allocation11 + $0x148] sm:$0xf]
    %v671 = vld [vmem:[#allocation11 + $0x14c] sm:$0xf]
    %v672 = vld [vmem:[#allocation11 + $0x150] sm:$0xf]
    %v673 = vld [vmem:[#allocation11 + $0x154] sm:$0xf]
    %v674 = vld [vmem:[#allocation11 + $0x158] sm:$0xf]
    %v675 = vld [vmem:[#allocation11 + $0x15c] sm:$0xf]
    %v676 = vld [vmem:[#allocation11 + $0x160] sm:$0xf]
    %v677 = vld [vmem:[#allocation11 + $0x164] sm:$0xf]
    %v678 = vld [vmem:[#allocation11 + $0x168] sm:$0xf]
    %v679 = vld [vmem:[#allocation11 + $0x16c] sm:$0xf]
    %v680 = vld [vmem:[#allocation11 + $0x170] sm:$0xf]
    %v681 = vld [vmem:[#allocation11 + $0x174] sm:$0xf]
    %v682 = vld [vmem:[#allocation11 + $0x178] sm:$0xf]
    %v683 = vld [vmem:[#allocation11 + $0x17c] sm:$0xf]
    %v684 = vld [vmem:[#allocation11 + $0x180] sm:$0xf]
    %v685 = vld [vmem:[#allocation11 + $0x184] sm:$0xf]
    %v686 = vld [vmem:[#allocation11 + $0x188] sm:$0xf]
    %v687 = vld [vmem:[#allocation11 + $0x18c] sm:$0xf]
    %v688 = vld [vmem:[#allocation11 + $0x190] sm:$0xf]
    %v689 = vld [vmem:[#allocation11 + $0x194] sm:$0xf]
    %v690 = vld [vmem:[#allocation11 + $0x198] sm:$0xf]
    %v691 = vld [vmem:[#allocation11 + $0x19c] sm:$0xf]
    %v692 = vld [vmem:[#allocation11 + $0x1a0] sm:$0xf]
    %v693 = vld [vmem:[#allocation11 + $0x1a4] sm:$0xf]
    %v694 = vld [vmem:[#allocation11 + $0x1a8] sm:$0xf]
    %v695 = vld [vmem:[#allocation11 + $0x1ac] sm:$0xf]
    %v696 = vld [vmem:[#allocation11 + $0x1b0] sm:$0xf]
    %v697 = vld [vmem:[#allocation11 + $0x1b4] sm:$0xf]
    %v698 = vld [vmem:[#allocation11 + $0x1b8] sm:$0xf]
    %v699 = vld [vmem:[#allocation11 + $0x1bc] sm:$0xf]
    %v700 = vld [vmem:[#allocation11 + $0x1c0] sm:$0xf]
    %v701 = vld [vmem:[#allocation11 + $0x1c4] sm:$0xf]
    %v702 = vld [vmem:[#allocation11 + $0x1c8] sm:$0xf]
    %v703 = vld [vmem:[#allocation11 + $0x1cc] sm:$0xf]
    %v704 = vld [vmem:[#allocation11 + $0x1d0] sm:$0xf]
    %v705 = vld [vmem:[#allocation11 + $0x1d4] sm:$0xf]
    %v706 = vld [vmem:[#allocation11 + $0x1d8] sm:$0xf]
    %v707 = vld [vmem:[#allocation11 + $0x1dc] sm:$0xf]
    %v708 = vld [vmem:[#allocation11 + $0x1e0] sm:$0xf]
    %v709 = vld [vmem:[#allocation11 + $0x1e4] sm:$0xf]
    %v710 = vld [vmem:[#allocation11 + $0x1e8] sm:$0xf]
    %v711 = vld [vmem:[#allocation11 + $0x1ec] sm:$0xf]
    %v712 = vld [vmem:[#allocation11 + $0x1f0] sm:$0xf]
    %v713 = vld [vmem:[#allocation11 + $0x1f4] sm:$0xf]
    %v714 = vld [vmem:[#allocation11 + $0x1f8] sm:$0xf]
    %v715 = vld [vmem:[#allocation11 + $0x1fc] sm:$0xf]
    %v716 = vld [vmem:[%s8] sm:$0x1]
    %v718 = vlaneseq
    %v719 = vshrl.u32 %v718, 7
    %v720 = vsub.s32 0, %v719
    %v721 = vrot.slane %v716, %v720
    %v851 = vunpack.c.l.b16 %v588
    %v852 = vunpack.c.l.b16 %v589
    %v853 = vunpack.c.l.b16 %v590
    %v854 = vunpack.c.l.b16 %v591
    %v855 = vunpack.c.l.b16 %v592
    %v856 = vunpack.c.l.b16 %v593
    %v857 = vunpack.c.l.b16 %v594
    %v858 = vunpack.c.l.b16 %v595
    %v859 = vunpack.c.l.b16 %v596
    %v860 = vunpack.c.l.b16 %v597
    %v861 = vunpack.c.l.b16 %v598
    %v862 = vunpack.c.l.b16 %v599
    %v863 = vunpack.c.l.b16 %v600
    %v864 = vunpack.c.l.b16 %v601
    %v865 = vunpack.c.l.b16 %v602
    %v866 = vunpack.c.l.b16 %v603
    %v867 = vunpack.c.l.b16 %v604
    %v868 = vunpack.c.l.b16 %v605
    %v869 = vunpack.c.l.b16 %v606
    %v870 = vunpack.c.l.b16 %v607
    %v871 = vunpack.c.l.b16 %v608
    %v872 = vunpack.c.l.b16 %v609
    %v873 = vunpack.c.l.b16 %v610
    %v874 = vunpack.c.l.b16 %v611
    %v875 = vunpack.c.l.b16 %v612
    %v876 = vunpack.c.l.b16 %v613
    %v877 = vunpack.c.l.b16 %v614
    %v878 = vunpack.c.l.b16 %v615
    %v879 = vunpack.c.l.b16 %v616
    %v880 = vunpack.c.l.b16 %v617
    %v881 = vunpack.c.l.b16 %v618
    %v882 = vunpack.c.l.b16 %v619
    %v883 = vunpack.c.l.b16 %v620
    %v884 = vunpack.c.l.b16 %v621
    %v885 = vunpack.c.l.b16 %v622
    %v886 = vunpack.c.l.b16 %v623
    %v887 = vunpack.c.l.b16 %v624
    %v888 = vunpack.c.l.b16 %v625
    %v889 = vunpack.c.l.b16 %v626
    %v890 = vunpack.c.l.b16 %v627
    %v891 = vunpack.c.l.b16 %v628
    %v892 = vunpack.c.l.b16 %v629
    %v893 = vunpack.c.l.b16 %v630
    %v894 = vunpack.c.l.b16 %v631
    %v895 = vunpack.c.l.b16 %v632
    %v896 = vunpack.c.l.b16 %v633
    %v897 = vunpack.c.l.b16 %v634
    %v898 = vunpack.c.l.b16 %v635
    %v899 = vunpack.c.l.b16 %v636
    %v900 = vunpack.c.l.b16 %v637
    %v901 = vunpack.c.l.b16 %v638
    %v902 = vunpack.c.l.b16 %v639
    %v903 = vunpack.c.l.b16 %v640
    %v904 = vunpack.c.l.b16 %v641
    %v905 = vunpack.c.l.b16 %v642
    %v906 = vunpack.c.l.b16 %v643
    %v907 = vunpack.c.l.b16 %v644
    %v908 = vunpack.c.l.b16 %v645
    %v909 = vunpack.c.l.b16 %v646
    %v910 = vunpack.c.l.b16 %v647
    %v911 = vunpack.c.l.b16 %v648
    %v912 = vunpack.c.l.b16 %v649
    %v913 = vunpack.c.l.b16 %v650
    %v914 = vunpack.c.l.b16 %v651
    %v915 = vunpack.c.l.b16 %v652
    %v916 = vunpack.c.l.b16 %v653
    %v917 = vunpack.c.l.b16 %v654
    %v918 = vunpack.c.l.b16 %v655
    %v919 = vunpack.c.l.b16 %v656
    %v920 = vunpack.c.l.b16 %v657
    %v921 = vunpack.c.l.b16 %v658
    %v922 = vunpack.c.l.b16 %v659
    %v923 = vunpack.c.l.b16 %v660
    %v924 = vunpack.c.l.b16 %v661
    %v925 = vunpack.c.l.b16 %v662
    %v926 = vunpack.c.l.b16 %v663
    %v927 = vunpack.c.l.b16 %v664
    %v928 = vunpack.c.l.b16 %v665
    %v929 = vunpack.c.l.b16 %v666
    %v930 = vunpack.c.l.b16 %v667
    %v931 = vunpack.c.l.b16 %v668
    %v932 = vunpack.c.l.b16 %v669
    %v933 = vunpack.c.l.b16 %v670
    %v934 = vunpack.c.l.b16 %v671
    %v935 = vunpack.c.l.b16 %v672
    %v936 = vunpack.c.l.b16 %v673
    %v937 = vunpack.c.l.b16 %v674
    %v938 = vunpack.c.l.b16 %v675
    %v939 = vunpack.c.l.b16 %v676
    %v940 = vunpack.c.l.b16 %v677
    %v941 = vunpack.c.l.b16 %v678
    %v942 = vunpack.c.l.b16 %v679
    %v943 = vunpack.c.l.b16 %v680
    %v944 = vunpack.c.l.b16 %v681
    %v945 = vunpack.c.l.b16 %v682
    %v946 = vunpack.c.l.b16 %v683
    %v947 = vunpack.c.l.b16 %v684
    %v948 = vunpack.c.l.b16 %v685
    %v949 = vunpack.c.l.b16 %v686
    %v950 = vunpack.c.l.b16 %v687
    %v951 = vunpack.c.l.b16 %v688
    %v952 = vunpack.c.l.b16 %v689
    %v953 = vunpack.c.l.b16 %v690
    %v954 = vunpack.c.l.b16 %v691
    %v955 = vunpack.c.l.b16 %v692
    %v956 = vunpack.c.l.b16 %v693
    %v957 = vunpack.c.l.b16 %v694
    %v958 = vunpack.c.l.b16 %v695
    %v959 = vunpack.c.l.b16 %v696
    %v960 = vunpack.c.l.b16 %v697
    %v961 = vunpack.c.l.b16 %v698
    %v962 = vunpack.c.l.b16 %v699
    %v963 = vunpack.c.l.b16 %v700
    %v964 = vunpack.c.l.b16 %v701
    %v965 = vunpack.c.l.b16 %v702
    %v966 = vunpack.c.l.b16 %v703
    %v967 = vunpack.c.l.b16 %v704
    %v968 = vunpack.c.l.b16 %v705
    %v969 = vunpack.c.l.b16 %v706
    %v970 = vunpack.c.l.b16 %v707
    %v971 = vunpack.c.l.b16 %v708
    %v972 = vunpack.c.l.b16 %v709
    %v973 = vunpack.c.l.b16 %v710
    %v974 = vunpack.c.l.b16 %v711
    %v975 = vunpack.c.l.b16 %v712
    %v976 = vunpack.c.l.b16 %v713
    %v977 = vunpack.c.l.b16 %v714
    %v978 = vunpack.c.l.b16 %v715
    %v979 = vpack.c.b16 %v852, %v851
    %v980 = vpack.c.b16 %v854, %v853
    %v981 = vpack.c.b16 %v856, %v855
    %v982 = vpack.c.b16 %v858, %v857
    %v983 = vpack.c.b16 %v860, %v859
    %v984 = vpack.c.b16 %v862, %v861
    %v985 = vpack.c.b16 %v864, %v863
    %v986 = vpack.c.b16 %v866, %v865
    %v987 = vpack.c.b16 %v868, %v867
    %v988 = vpack.c.b16 %v870, %v869
    %v989 = vpack.c.b16 %v872, %v871
    %v990 = vpack.c.b16 %v874, %v873
    %v991 = vpack.c.b16 %v876, %v875
    %v992 = vpack.c.b16 %v878, %v877
    %v993 = vpack.c.b16 %v880, %v879
    %v994 = vpack.c.b16 %v882, %v881
    %v995 = vpack.c.b16 %v884, %v883
    %v996 = vpack.c.b16 %v886, %v885
    %v997 = vpack.c.b16 %v888, %v887
    %v998 = vpack.c.b16 %v890, %v889
    %v999 = vpack.c.b16 %v892, %v891
    %v1000 = vpack.c.b16 %v894, %v893
    %v1001 = vpack.c.b16 %v896, %v895
    %v1002 = vpack.c.b16 %v898, %v897
    %v1003 = vpack.c.b16 %v900, %v899
    %v1004 = vpack.c.b16 %v902, %v901
    %v1005 = vpack.c.b16 %v904, %v903
    %v1006 = vpack.c.b16 %v906, %v905
    %v1007 = vpack.c.b16 %v908, %v907
    %v1008 = vpack.c.b16 %v910, %v909
    %v1009 = vpack.c.b16 %v912, %v911
    %v1010 = vpack.c.b16 %v914, %v913
    %v1011 = vpack.c.b16 %v916, %v915
    %v1012 = vpack.c.b16 %v918, %v917
    %v1013 = vpack.c.b16 %v920, %v919
    %v1014 = vpack.c.b16 %v922, %v921
    %v1015 = vpack.c.b16 %v924, %v923
    %v1016 = vpack.c.b16 %v926, %v925
    %v1017 = vpack.c.b16 %v928, %v927
    %v1018 = vpack.c.b16 %v930, %v929
    %v1019 = vpack.c.b16 %v932, %v931
    %v1020 = vpack.c.b16 %v934, %v933
    %v1021 = vpack.c.b16 %v936, %v935
    %v1022 = vpack.c.b16 %v938, %v937
    %v1023 = vpack.c.b16 %v940, %v939
    %v1024 = vpack.c.b16 %v942, %v941
    %v1025 = vpack.c.b16 %v944, %v943
    %v1026 = vpack.c.b16 %v946, %v945
    %v1027 = vpack.c.b16 %v948, %v947
    %v1028 = vpack.c.b16 %v950, %v949
    %v1029 = vpack.c.b16 %v952, %v951
    %v1030 = vpack.c.b16 %v954, %v953
    %v1031 = vpack.c.b16 %v956, %v955
    %v1032 = vpack.c.b16 %v958, %v957
    %v1033 = vpack.c.b16 %v960, %v959
    %v1034 = vpack.c.b16 %v962, %v961
    %v1035 = vpack.c.b16 %v964, %v963
    %v1036 = vpack.c.b16 %v966, %v965
    %v1037 = vpack.c.b16 %v968, %v967
    %v1038 = vpack.c.b16 %v970, %v969
    %v1039 = vpack.c.b16 %v972, %v971
    %v1040 = vpack.c.b16 %v974, %v973
    %v1041 = vpack.c.b16 %v976, %v975
    %v1042 = vpack.c.b16 %v978, %v977
    %1107 = vmatprep.subr.bf16.mxu0 0
    %1108 = vmatpush1.bf16.msra.mxu0 %v979
    %1109 = vmatprep.subr.bf16.mxu0 0
    %1110 = vmatpush1.bf16.msra.mxu0 %v980
    %1111 = vmatprep.subr.bf16.mxu0 0
    %1112 = vmatpush1.bf16.msra.mxu0 %v981
    %1113 = vmatprep.subr.bf16.mxu0 0
    %1114 = vmatpush1.bf16.msra.mxu0 %v982
    %1115 = vmatprep.subr.bf16.mxu0 0
    %1116 = vmatpush1.bf16.msra.mxu0 %v983
    %1117 = vmatprep.subr.bf16.mxu0 0
    %1118 = vmatpush1.bf16.msra.mxu0 %v984
    %1119 = vmatprep.subr.bf16.mxu0 0
    %1120 = vmatpush1.bf16.msra.mxu0 %v985
    %1121 = vmatprep.subr.bf16.mxu0 0
    %1122 = vmatpush1.bf16.msra.mxu0 %v986
    %1123 = vmatprep.subr.bf16.mxu0 0
    %1124 = vmatpush1.bf16.msra.mxu0 %v987
    %1125 = vmatprep.subr.bf16.mxu0 0
    %1126 = vmatpush1.bf16.msra.mxu0 %v988
    %1127 = vmatprep.subr.bf16.mxu0 0
    %1128 = vmatpush1.bf16.msra.mxu0 %v989
    %1129 = vmatprep.subr.bf16.mxu0 0
    %1130 = vmatpush1.bf16.msra.mxu0 %v990
    %1131 = vmatprep.subr.bf16.mxu0 0
    %1132 = vmatpush1.bf16.msra.mxu0 %v991
    %1133 = vmatprep.subr.bf16.mxu0 0
    %1134 = vmatpush1.bf16.msra.mxu0 %v992
    %1135 = vmatprep.subr.bf16.mxu0 0
    %1136 = vmatpush1.bf16.msra.mxu0 %v993
    %1137 = vmatprep.subr.bf16.mxu0 0
    %1138 = vmatpush1.bf16.msra.mxu0 %v994
    %1139 = vmatprep.mubr.bf16.mxu0 %v581
    %1140 = vmatmul.mubr.bf16.gmra.mrb[0].mxu0 %v580
    %v1141 = vpop.f32.mrb[0].mxu0
    %v1142 = vadd.f32 %v721, %v1141
    %v1143 = vpop.f32.mrb[0].mxu0
    %v1144 = vpop.f32.mrb[0].mxu0
    %v1145 = vpop.f32.mrb[0].mxu0
    %1146 = vdwg.mxu0
    %1147 = vmatprep.subr.bf16.mxu0 0
    %1148 = vmatpush1.bf16.msra.mxu0 %v995
    %1149 = vmatprep.subr.bf16.mxu0 0
    %1150 = vmatpush1.bf16.msra.mxu0 %v996
    %1151 = vmatprep.subr.bf16.mxu0 0
    %1152 = vmatpush1.bf16.msra.mxu0 %v997
    %1153 = vmatprep.subr.bf16.mxu0 0
    %1154 = vmatpush1.bf16.msra.mxu0 %v998
    %1155 = vmatprep.subr.bf16.mxu0 0
    %1156 = vmatpush1.bf16.msra.mxu0 %v999
    %1157 = vmatprep.subr.bf16.mxu0 0
    %1158 = vmatpush1.bf16.msra.mxu0 %v1000
    %1159 = vmatprep.subr.bf16.mxu0 0
    %1160 = vmatpush1.bf16.msra.mxu0 %v1001
    %1161 = vmatprep.subr.bf16.mxu0 0
    %1162 = vmatpush1.bf16.msra.mxu0 %v1002
    %1163 = vmatprep.subr.bf16.mxu0 0
    %1164 = vmatpush1.bf16.msra.mxu0 %v1003
    %1165 = vmatprep.subr.bf16.mxu0 0
    %1166 = vmatpush1.bf16.msra.mxu0 %v1004
    %1167 = vmatprep.subr.bf16.mxu0 0
    %1168 = vmatpush1.bf16.msra.mxu0 %v1005
    %1169 = vmatprep.subr.bf16.mxu0 0
    %1170 = vmatpush1.bf16.msra.mxu0 %v1006
    %1171 = vmatprep.subr.bf16.mxu0 0
    %1172 = vmatpush1.bf16.msra.mxu0 %v1007
    %1173 = vmatprep.subr.bf16.mxu0 0
    %1174 = vmatpush1.bf16.msra.mxu0 %v1008
    %1175 = vmatprep.subr.bf16.mxu0 0
    %1176 = vmatpush1.bf16.msra.mxu0 %v1009
    %1177 = vmatprep.subr.bf16.mxu0 0
    %1178 = vmatpush1.bf16.msra.mxu0 %v1010
    %1179 = vmatprep.mubr.bf16.mxu0 %v583
    %1180 = vmatmul.mubr.bf16.gmra.mrb[0].mxu0 %v582
    %v1181 = vpop.f32.mrb[0].mxu0
    %v1182 = vadd.f32 %v1142, %v1181
    %v1183 = vpop.f32.mrb[0].mxu0
    %v1184 = vpop.f32.mrb[0].mxu0
    %v1185 = vpop.f32.mrb[0].mxu0
    %1186 = vdwg.mxu0
    %1187 = vmatprep.subr.bf16.mxu0 0
    %1188 = vmatpush1.bf16.msra.mxu0 %v1011
    %1189 = vmatprep.subr.bf16.mxu0 0
    %1190 = vmatpush1.bf16.msra.mxu0 %v1012
    %1191 = vmatprep.subr.bf16.mxu0 0
    %1192 = vmatpush1.bf16.msra.mxu0 %v1013
    %1193 = vmatprep.subr.bf16.mxu0 0
    %1194 = vmatpush1.bf16.msra.mxu0 %v1014
    %1195 = vmatprep.subr.bf16.mxu0 0
    %1196 = vmatpush1.bf16.msra.mxu0 %v1015
    %1197 = vmatprep.subr.bf16.mxu0 0
    %1198 = vmatpush1.bf16.msra.mxu0 %v1016
    %1199 = vmatprep.subr.bf16.mxu0 0
    %1200 = vmatpush1.bf16.msra.mxu0 %v1017
    %1201 = vmatprep.subr.bf16.mxu0 0
    %1202 = vmatpush1.bf16.msra.mxu0 %v1018
    %1203 = vmatprep.subr.bf16.mxu0 0
    %1204 = vmatpush1.bf16.msra.mxu0 %v1019
    %1205 = vmatprep.subr.bf16.mxu0 0
    %1206 = vmatpush1.bf16.msra.mxu0 %v1020
    %1207 = vmatprep.subr.bf16.mxu0 0
    %1208 = vmatpush1.bf16.msra.mxu0 %v1021
    %1209 = vmatprep.subr.bf16.mxu0 0
    %1210 = vmatpush1.bf16.msra.mxu0 %v1022
    %1211 = vmatprep.subr.bf16.mxu0 0
    %1212 = vmatpush1.bf16.msra.mxu0 %v1023
    %1213 = vmatprep.subr.bf16.mxu0 0
    %1214 = vmatpush1.bf16.msra.mxu0 %v1024
    %1215 = vmatprep.subr.bf16.mxu0 0
    %1216 = vmatpush1.bf16.msra.mxu0 %v1025
    %1217 = vmatprep.subr.bf16.mxu0 0
    %1218 = vmatpush1.bf16.msra.mxu0 %v1026
    %1219 = vmatprep.mubr.bf16.mxu0 %v585
    %1220 = vmatmul.mubr.bf16.gmra.mrb[0].mxu0 %v584
    %v1221 = vpop.f32.mrb[0].mxu0
    %v1222 = vadd.f32 %v1182, %v1221
    %v1223 = vpop.f32.mrb[0].mxu0
    %v1224 = vpop.f32.mrb[0].mxu0
    %v1225 = vpop.f32.mrb[0].mxu0
    %1226 = vdwg.mxu0
    %1227 = vmatprep.subr.bf16.mxu0 0
    %1228 = vmatpush1.bf16.msra.mxu0 %v1027
    %1229 = vmatprep.subr.bf16.mxu0 0
    %1230 = vmatpush1.bf16.msra.mxu0 %v1028
    %1231 = vmatprep.subr.bf16.mxu0 0
    %1232 = vmatpush1.bf16.msra.mxu0 %v1029
    %1233 = vmatprep.subr.bf16.mxu0 0
    %1234 = vmatpush1.bf16.msra.mxu0 %v1030
    %1235 = vmatprep.subr.bf16.mxu0 0
    %1236 = vmatpush1.bf16.msra.mxu0 %v1031
    %1237 = vmatprep.subr.bf16.mxu0 0
    %1238 = vmatpush1.bf16.msra.mxu0 %v1032
    %1239 = vmatprep.subr.bf16.mxu0 0
    %1240 = vmatpush1.bf16.msra.mxu0 %v1033
    %1241 = vmatprep.subr.bf16.mxu0 0
    %1242 = vmatpush1.bf16.msra.mxu0 %v1034
    %1243 = vmatprep.subr.bf16.mxu0 0
    %1244 = vmatpush1.bf16.msra.mxu0 %v1035
    %1245 = vmatprep.subr.bf16.mxu0 0
    %1246 = vmatpush1.bf16.msra.mxu0 %v1036
    %1247 = vmatprep.subr.bf16.mxu0 0
    %1248 = vmatpush1.bf16.msra.mxu0 %v1037
    %1249 = vmatprep.subr.bf16.mxu0 0
    %1250 = vmatpush1.bf16.msra.mxu0 %v1038
    %1251 = vmatprep.subr.bf16.mxu0 0
    %1252 = vmatpush1.bf16.msra.mxu0 %v1039
    %1253 = vmatprep.subr.bf16.mxu0 0
    %1254 = vmatpush1.bf16.msra.mxu0 %v1040
    %1255 = vmatprep.subr.bf16.mxu0 0
    %1256 = vmatpush1.bf16.msra.mxu0 %v1041
    %1257 = vmatprep.subr.bf16.mxu0 0
    %1258 = vmatpush1.bf16.msra.mxu0 %v1042
    %1259 = vmatprep.mubr.bf16.mxu0 %v587
    %1260 = vmatmul.mubr.bf16.gmra.mrb[0].mxu0 %v586
    %v1261 = vpop.f32.mrb[0].mxu0
    %v1262 = vadd.f32 %v1222, %v1261
    %v1263 = vpop.f32.mrb[0].mxu0
    %v1264 = vpop.f32.mrb[0].mxu0
    %v1265 = vpop.f32.mrb[0].mxu0
    %1266 = vdwg.mxu0
    %vm1267 = vcmp.ge.f32.partialorder %v1262, 0.0
    %v1268 = vmul.f32 %v1262, 0.01
    %v1269 = vsel %vm1267, %v1262, %v1268
    %v1270 = vpack.c.bf16 %v1269, %v1269
    %v1271 = vld [vmem:[#allocation13] sm:$0xf]
    %v1272 = vld [vmem:[#allocation13 + $0x4] sm:$0xf]
    %v1273 = vld [vmem:[#allocation13 + $0x8] sm:$0xf]
    %v1274 = vld [vmem:[#allocation13 + $0xc] sm:$0xf]
    %v1275 = vld [vmem:[#allocation13 + $0x10] sm:$0xf]
    %v1276 = vld [vmem:[#allocation13 + $0x14] sm:$0xf]
    %v1277 = vld [vmem:[#allocation13 + $0x18] sm:$0xf]
    %v1278 = vld [vmem:[#allocation13 + $0x1c] sm:$0xf]
    %v1279 = vld [vmem:[#allocation13 + $0x20] sm:$0xf]
    %v1280 = vld [vmem:[#allocation13 + $0x24] sm:$0xf]
    %v1281 = vld [vmem:[#allocation13 + $0x28] sm:$0xf]
    %v1282 = vld [vmem:[#allocation13 + $0x2c] sm:$0xf]
    %v1283 = vld [vmem:[#allocation13 + $0x30] sm:$0xf]
    %v1284 = vld [vmem:[#allocation13 + $0x34] sm:$0xf]
    %v1285 = vld [vmem:[#allocation13 + $0x38] sm:$0xf]
    %v1286 = vld [vmem:[#allocation13 + $0x3c] sm:$0xf]
    %v1287 = vld [vmem:[%s10] sm:$0x1]
    %v1289 = vlaneseq
    %v1290 = vshrl.u32 %v1289, 7
    %v1291 = vsub.s32 0, %v1290
    %v1292 = vrot.slane %v1287, %v1291
    %v1310 = vunpack.c.l.b16 %v1271
    %v1311 = vunpack.c.l.b16 %v1272
    %v1312 = vunpack.c.l.b16 %v1273
    %v1313 = vunpack.c.l.b16 %v1274
    %v1314 = vunpack.c.l.b16 %v1275
    %v1315 = vunpack.c.l.b16 %v1276
    %v1316 = vunpack.c.l.b16 %v1277
    %v1317 = vunpack.c.l.b16 %v1278
    %v1318 = vunpack.c.l.b16 %v1279
    %v1319 = vunpack.c.l.b16 %v1280
    %v1320 = vunpack.c.l.b16 %v1281
    %v1321 = vunpack.c.l.b16 %v1282
    %v1322 = vunpack.c.l.b16 %v1283
    %v1323 = vunpack.c.l.b16 %v1284
    %v1324 = vunpack.c.l.b16 %v1285
    %v1325 = vunpack.c.l.b16 %v1286
    %v1326 = vpack.c.b16 %v1311, %v1310
    %v1327 = vpack.c.b16 %v1313, %v1312
    %v1328 = vpack.c.b16 %v1315, %v1314
    %v1329 = vpack.c.b16 %v1317, %v1316
    %v1330 = vpack.c.b16 %v1319, %v1318
    %v1331 = vpack.c.b16 %v1321, %v1320
    %v1332 = vpack.c.b16 %v1323, %v1322
    %v1333 = vpack.c.b16 %v1325, %v1324
    %1342 = vmatprep.subr.bf16.mxu0 0
    %1343 = vmatpush1.bf16.msra.mxu0 %v1326
    %1344 = vmatprep.subr.bf16.mxu0 0
    %1345 = vmatpush1.bf16.msra.mxu0 %v1327
    %1346 = vmatprep.subr.bf16.mxu0 0
    %1347 = vmatpush1.bf16.msra.mxu0 %v1328
    %1348 = vmatprep.subr.bf16.mxu0 0
    %1349 = vmatpush1.bf16.msra.mxu0 %v1329
    %1350 = vmatprep.subr.bf16.mxu0 0
    %1351 = vmatpush1.bf16.msra.mxu0 %v1330
    %1352 = vmatprep.subr.bf16.mxu0 0
    %1353 = vmatpush1.bf16.msra.mxu0 %v1331
    %1354 = vmatprep.subr.bf16.mxu0 0
    %1355 = vmatpush1.bf16.msra.mxu0 %v1332
    %1356 = vmatprep.subr.bf16.mxu0 0
    %1357 = vmatpush1.bf16.msra.mxu0 %v1333
    %1358 = vmatprep.subr.bf16.mxu0 0
    %1359 = vmatpush1.bf16.msra.mxu0 0
    %1360 = vmatprep.subr.bf16.mxu0 0
    %1361 = vmatpush1.bf16.msra.mxu0 0
    %1362 = vmatprep.subr.bf16.mxu0 0
    %1363 = vmatpush1.bf16.msra.mxu0 0
    %1364 = vmatprep.subr.bf16.mxu0 0
    %1365 = vmatpush1.bf16.msra.mxu0 0
    %1366 = vmatprep.subr.bf16.mxu0 0
    %1367 = vmatpush1.bf16.msra.mxu0 0
    %1368 = vmatprep.subr.bf16.mxu0 0
    %1369 = vmatpush1.bf16.msra.mxu0 0
    %1370 = vmatprep.subr.bf16.mxu0 0
    %1371 = vmatpush1.bf16.msra.mxu0 0
    %1372 = vmatprep.subr.bf16.mxu0 0
    %1373 = vmatpush1.bf16.msra.mxu0 0
    %1374 = vmatprep.mubr.bf16.mxu0 0
    %1375 = vmatmul.mubr.bf16.gmra.mrb[0].mxu0 %v1270
    %v1376 = vpop.f32.mrb[0].mxu0
    %v1377 = vadd.f32 %v1292, %v1376
    %v1378 = vpop.f32.mrb[0].mxu0
    %v1379 = vpop.f32.mrb[0].mxu0
    %v1380 = vpop.f32.mrb[0].mxu0
    %1381 = vdwg.mxu0
    %v1382 = vld [vmem:[#allocation14] sm:$0xf]
    %v1383 = vld [vmem:[#allocation14 + $0x4] sm:$0xf]
    %v1384 = vld [vmem:[#allocation14 + $0x8] sm:$0xf]
    %v1385 = vld [vmem:[#allocation14 + $0xc] sm:$0xf]
    %v1386 = vld [vmem:[#allocation14 + $0x10] sm:$0xf]
    %v1387 = vld [vmem:[#allocation14 + $0x14] sm:$0xf]
    %v1388 = vld [vmem:[#allocation14 + $0x18] sm:$0xf]
    %v1389 = vld [vmem:[#allocation14 + $0x1c] sm:$0xf]
    %v1390 = vld [vmem:[#allocation14 + $0x20] sm:$0xf]
    %v1391 = vld [vmem:[#allocation14 + $0x24] sm:$0xf]
    %v1392 = vld [vmem:[#allocation14 + $0x28] sm:$0xf]
    %v1393 = vld [vmem:[#allocation14 + $0x2c] sm:$0xf]
    %v1394 = vld [vmem:[#allocation14 + $0x30] sm:$0xf]
    %v1395 = vld [vmem:[#allocation14 + $0x34] sm:$0xf]
    %v1396 = vld [vmem:[#allocation14 + $0x38] sm:$0xf]
    %v1397 = vld [vmem:[#allocation14 + $0x3c] sm:$0xf]
    %v1398 = vld [vmem:[%s12] sm:$0x1]
    %v1400 = vlaneseq
    %v1401 = vshrl.u32 %v1400, 7
    %v1402 = vsub.s32 0, %v1401
    %v1403 = vrot.slane %v1398, %v1402
    %v1421 = vunpack.c.l.b16 %v1382
    %v1422 = vunpack.c.l.b16 %v1383
    %v1423 = vunpack.c.l.b16 %v1384
    %v1424 = vunpack.c.l.b16 %v1385
    %v1425 = vunpack.c.l.b16 %v1386
    %v1426 = vunpack.c.l.b16 %v1387
    %v1427 = vunpack.c.l.b16 %v1388
    %v1428 = vunpack.c.l.b16 %v1389
    %v1429 = vunpack.c.l.b16 %v1390
    %v1430 = vunpack.c.l.b16 %v1391
    %v1431 = vunpack.c.l.b16 %v1392
    %v1432 = vunpack.c.l.b16 %v1393
    %v1433 = vunpack.c.l.b16 %v1394
    %v1434 = vunpack.c.l.b16 %v1395
    %v1435 = vunpack.c.l.b16 %v1396
    %v1436 = vunpack.c.l.b16 %v1397
    %v1437 = vpack.c.b16 %v1422, %v1421
    %v1438 = vpack.c.b16 %v1424, %v1423
    %v1439 = vpack.c.b16 %v1426, %v1425
    %v1440 = vpack.c.b16 %v1428, %v1427
    %v1441 = vpack.c.b16 %v1430, %v1429
    %v1442 = vpack.c.b16 %v1432, %v1431
    %v1443 = vpack.c.b16 %v1434, %v1433
    %v1444 = vpack.c.b16 %v1436, %v1435
    %1453 = vmatprep.subr.bf16.mxu0 0
    %1454 = vmatpush1.bf16.msra.mxu0 %v1437
    %1455 = vmatprep.subr.bf16.mxu0 0
    %1456 = vmatpush1.bf16.msra.mxu0 %v1438
    %1457 = vmatprep.subr.bf16.mxu0 0
    %1458 = vmatpush1.bf16.msra.mxu0 %v1439
    %1459 = vmatprep.subr.bf16.mxu0 0
    %1460 = vmatpush1.bf16.msra.mxu0 %v1440
    %1461 = vmatprep.subr.bf16.mxu0 0
    %1462 = vmatpush1.bf16.msra.mxu0 %v1441
    %1463 = vmatprep.subr.bf16.mxu0 0
    %1464 = vmatpush1.bf16.msra.mxu0 %v1442
    %1465 = vmatprep.subr.bf16.mxu0 0
    %1466 = vmatpush1.bf16.msra.mxu0 %v1443
    %1467 = vmatprep.subr.bf16.mxu0 0
    %1468 = vmatpush1.bf16.msra.mxu0 %v1444
    %1469 = vmatprep.subr.bf16.mxu0 0
    %1470 = vmatpush1.bf16.msra.mxu0 0
    %1471 = vmatprep.subr.bf16.mxu0 0
    %1472 = vmatpush1.bf16.msra.mxu0 0
    %1473 = vmatprep.subr.bf16.mxu0 0
    %1474 = vmatpush1.bf16.msra.mxu0 0
    %1475 = vmatprep.subr.bf16.mxu0 0
    %1476 = vmatpush1.bf16.msra.mxu0 0
    %1477 = vmatprep.subr.bf16.mxu0 0
    %1478 = vmatpush1.bf16.msra.mxu0 0
    %1479 = vmatprep.subr.bf16.mxu0 0
    %1480 = vmatpush1.bf16.msra.mxu0 0
    %1481 = vmatprep.subr.bf16.mxu0 0
    %1482 = vmatpush1.bf16.msra.mxu0 0
    %1483 = vmatprep.subr.bf16.mxu0 0
    %1484 = vmatpush1.bf16.msra.mxu0 0
    %1485 = vmatprep.mubr.bf16.mxu0 0
    %1486 = vmatmul.mubr.bf16.gmra.mrb[0].mxu0 %v1270
    %v1487 = vpop.f32.mrb[0].mxu0
    %v1488 = vadd.f32 %v1403, %v1487
    %v1489 = vpop.f32.mrb[0].mxu0
    %v1490 = vpop.f32.mrb[0].mxu0
    %v1491 = vpop.f32.mrb[0].mxu0
    %1492 = vdwg.mxu0
    %v1493 = vld [vmem:[#allocation8] sm:$0xff]
    %v1494 = vmul.f32 %v1488, 0.5
    %v1495 = vmul.f32 %v1494, 1.442695
    %v1496 = vpow.pop %v1495
    %v1497 = vmul.f32 %v1493, %v1496
    %v1498 = vadd.f32 %v1377, %v1497
    %v1499 = vadd.f32 %v1488, 1.0
    %v1500 = vld [vmem:[%s3] sm:$0xff]
    %v1501 = vsub.f32 %v1499, %v1500
    %v1502 = vld [vmem:[#allocation5] sm:$0xff]
    %v1503 = vsub.f32 %v1377, %v1502
    %v1504 = vmul.f32 %v1503, %v1503
    %v1505 = vmul.f32 %v1488, 1.442695
    %v1506 = vpow.pop %v1505
    %v1507 = vadd.f32 %v1504, %v1506
    %v1508 = vld [vmem:[#allocation7] sm:$0xff]
    %v1509 = vrcp.pop %v1508
    %v1510 = vmul.f32 %v1507, %v1509
    %v1511 = vsub.f32 %v1501, %v1510
    %1512 = vst [vmem:[#allocation16] sm:$0xff] %v1377
    %1513 = vst [vmem:[#allocation17] sm:$0xff] %v1488
    %1514 = vst [vmem:[#allocation19] sm:$0xff] %v1498
    %1515 = vadd.xlane.f32.xlu0 %v1511
    %v1516 = vpop.xlane.xlu0 %1515
    %vm1517 = vcmask 7168
    %1518 = vst.msk [vmem:[%s16] sm:$0xff] %vm1517, %v1516
    // Predicated region
    $region86: #{tpu_custom_call.1} parent=1 // pred_check
      _
    $region87: #{tpu_custom_call.1} parent=1 // pred_check_branch
      %1520 = sbr.rel (0) target = $region89
    $region88: #{tpu_custom_call.1} parent=1 // pred_region
      %s1522 = ssub.s32 128, 128
      %1523 = vsyncadd [#allocation4], %s1522
      %s1525 = sshll.u32 [#allocation16], 4
      %s1526 = int_to_ptr.vmem [resolvable:$true] %s1525
      %1528 = dma.vmem_to_hbm [thread:$0]  %s1526, 128, %s13, [#allocation4]
    $region89: #{tpu_custom_call.1} parent=1 // pred_fallthru
      _
    // Predicated region
    $region90: #{tpu_custom_call.1} parent=1 // pred_check
      _
    $region91: #{tpu_custom_call.1} parent=1 // pred_check_branch
      %1530 = sbr.rel (0) target = $region93
    $region92: #{tpu_custom_call.1} parent=1 // pred_region
      %s1532 = ssub.s32 128, 128
      %1533 = vsyncadd [#allocation18], %s1532
      %s1535 = sshll.u32 [#allocation17], 4
      %s1536 = int_to_ptr.vmem [resolvable:$true] %s1535
      %1538 = dma.vmem_to_hbm [thread:$0]  %s1536, 128, %s14, [#allocation18]
    $region93: #{tpu_custom_call.1} parent=1 // pred_fallthru
      _
    // Predicated region
    $region94: #{tpu_custom_call.1} parent=1 // pred_check
      _
    $region95: #{tpu_custom_call.1} parent=1 // pred_check_branch
      %1540 = sbr.rel (0) target = $region97
    $region96: #{tpu_custom_call.1} parent=1 // pred_region
      %s1542 = ssub.s32 128, 128
      %1543 = vsyncadd [#allocation18], %s1542
      %s1545 = sshll.u32 [#allocation19], 4
      %s1546 = int_to_ptr.vmem [resolvable:$true] %s1545
      %1548 = dma.vmem_to_hbm [thread:$0]  %s1546, 128, %s15, [#allocation18]
    $region97: #{tpu_custom_call.1} parent=1 // pred_fallthru
      _
    // Predicated region
    $region98: #{tpu_custom_call.1} parent=1 // pred_check
      _
    $region99: #{tpu_custom_call.1} parent=1 // pred_check_branch
      %1550 = sbr.rel (0) target = $region101
    $region100: #{tpu_custom_call.1} parent=1 // pred_region
      _
    $region101: #{tpu_custom_call.1} parent=1 // pred_fallthru
      _
    // Predicated region
    $region102: #{tpu_custom_call.1} parent=1 // pred_check
      _
    $region103: #{tpu_custom_call.1} parent=1 // pred_check_branch
      %1552 = sbr.rel (0) target = $region105
    $region104: #{tpu_custom_call.1} parent=1 // pred_region
      %1553 = dma.done [#allocation4], 128
    $region105: #{tpu_custom_call.1} parent=1 // pred_fallthru
      _
    // Predicated region
    $region106: #{tpu_custom_call.1} parent=1 // pred_check
      _
    $region107: #{tpu_custom_call.1} parent=1 // pred_check_branch
      %1555 = sbr.rel (0) target = $region109
    $region108: #{tpu_custom_call.1} parent=1 // pred_region
      %1556 = dma.done [#allocation18], 128
    $region109: #{tpu_custom_call.1} parent=1 // pred_fallthru
      _
    // Predicated region
    $region110: #{tpu_custom_call.1} parent=1 // pred_check
      _
    $region111: #{tpu_custom_call.1} parent=1 // pred_check_branch
      %1558 = sbr.rel (0) target = $region113
    $region112: #{tpu_custom_call.1} parent=1 // pred_region
      %1559 = dma.done [#allocation18], 128
    $region113: #{tpu_custom_call.1} parent=1 // pred_fallthru
      _
    // Predicated region
    $region114: #{tpu_custom_call.1} parent=1 // pred_check
      _
    $region115: #{tpu_custom_call.1} parent=1 // pred_check_branch
      %1561 = sbr.rel (0) target = $region117
    $region116: #{tpu_custom_call.1} parent=1 // pred_region
      _
    $region117: #{tpu_custom_call.1} parent=1 // pred_fallthru
      _
    %1562 = vsyncpa [#allocation3], 1
    %1563 = vsyncpa [#allocation6], 1
    %1564 = vsyncpa [#allocation9], 1
    %1565 = vsyncpa [#allocation12], 1
    %1566 = vsyncpa [#allocation15], 1
    %1567 = vsyncpa [#allocation4], 1
    %1568 = vsyncpa [#allocation18], 1

</llo_original>
